<compile_context>
chip_gen: v7x
topology: tpu7x:2x2x1
jax: 0.10.0
libtpu: 0.0.40
codegen_flags: <defaults>
</compile_context>

<pallas_src>
import jax
import jax.numpy as jnp
from jax import lax
from jax.experimental import pallas as pl
from jax.experimental.pallas import tpu as pltpu

EPS = 1e-5  # PyTorch BatchNorm2d default eps


def _aux_head_kernel(x_ref, bn_w1_ref, bn_scale_ref, bn_shift_ref, w2_ref, wc_ref, bc_ref,
                     out_ref):
    # x_ref: (B, 7, 7, C) tile of batch elements, NHWC, compute dtype (bf16 or f32).
    B = x_ref.shape[0]
    cdt = bn_w1_ref.dtype

    x = jnp.maximum(x_ref[...], 0.0)          # ReLU(inplace=True)

    # AvgPool2d(5, stride=2, padding=0) on 7x7 -> 4 pooled positions; f32 accumulation.
    pooled = []
    for i, j in ((0, 0), (0, 1), (1, 0), (1, 1)):          # p = 2*i + j
        win = x[:, 2 * i:2 * i + 5, 2 * j:2 * j + 5, :].astype(jnp.float32)   # (B,5,5,C)
        pooled.append(jnp.sum(jnp.sum(win, axis=1), axis=1) * (1.0 / 25.0))   # (B,C)
    pooled = jnp.concatenate(pooled, axis=0).astype(cdt)    # (4B, C), rows ordered p-major

    # Conv1x1 (all 4 pooled positions in one matmul) + folded BatchNorm + ReLU.
    y1 = jnp.dot(pooled, bn_w1_ref[...], preferred_element_type=jnp.float32)  # (4B,128) f32
    # TODO(synk): BatchNorm2d is inference-mode only (running stats folded into an affine);
    # train-mode batch statistics are not computed in-kernel.
    y1 = jnp.maximum(y1 * bn_scale_ref[...] + bn_shift_ref[...], 0.0)
    y1 = y1.astype(cdt)

    # Conv2d(128, 768, 2) over the 2x2 pooled map fused as one K=512 matmul: concatenate
    # the four per-position feature blocks along the lane axis (order matches w2 rows).
    y1c = jnp.concatenate(
        [y1[0:B], y1[B:2 * B], y1[2 * B:3 * B], y1[3 * B:4 * B]], axis=-1)     # (B, 512)
    y2 = jnp.maximum(jnp.dot(y1c, w2_ref[...], preferred_element_type=jnp.float32), 0.0)
    y2 = y2.astype(cdt)                                                        # (B, 768)

    # Linear classifier; output lane-padded to a multiple of 128 (sliced back outside).
    out_ref[...] = jnp.dot(y2, wc_ref[...], preferred_element_type=jnp.float32) + bc_ref[...]


def aux_head_forward(x_nchw, params, num_classes, *, b_tile=32, compute_dtype=jnp.bfloat16):
    """Runs the fused Pallas kernel.  x_nchw: (N, C, 7, 7) float32."""
    N, C, H, W = x_nchw.shape
    assert (H, W) == (7, 7), "classifier Linear(768, ...) requires a 7x7 input"
    w1, gamma, beta, r_mean, r_var, w2, wc, bc = params
    cdt = jnp.dtype(compute_dtype)

    ncls_pad = ((num_classes + 127) // 128) * 128            # lane-dense output width
    b_tile = max(1, min(b_tile, N))
    n_pad = pl.cdiv(N, b_tile) * b_tile

    # ---- plain-JAX glue: layout / parameter prep only ----
    # NCHW->NHWC transpose fused with the dtype cast: one pass over the activations.
    x_nhwc = jnp.transpose(x_nchw, (0, 2, 3, 1)).astype(cdt)                   # (N,7,7,C)
    if n_pad != N:
        x_nhwc = jnp.pad(x_nhwc, ((0, n_pad - N), (0, 0), (0, 0), (0, 0)))

    w1_mat = jnp.transpose(w1.reshape(128, C), (1, 0)).astype(cdt)             # (C, 128)
    inv_std = 1.0 / jnp.sqrt(r_var.astype(jnp.float32) + EPS)
    bn_scale = (gamma * inv_std).astype(jnp.float32).reshape(1, 128)
    bn_shift = (beta - r_mean * gamma * inv_std).astype(jnp.float32).reshape(1, 128)
    # (768,128,2,2) OIHW -> (kh,kw,cin,cout) -> (512,768); row = (2*kh+kw)*128 + cin,
    # matching the kernel's p-major feature concatenation.
    w2_mat = jnp.transpose(w2, (2, 3, 1, 0)).reshape(512, 768).astype(cdt)
    # Zero-padded classifier weight/bias so padded logits are exactly zero.
    wc_mat = jnp.zeros((768, ncls_pad), cdt).at[:, :num_classes].set(
        jnp.transpose(wc, (1, 0)).astype(cdt))
    bc_mat = jnp.zeros((1, ncls_pad), jnp.float32).at[:, :num_classes].set(
        bc.astype(jnp.float32))

    # Explicit VMEM budget: double-buffered x/out tiles + (double-buffered) weights + headroom,
    # clamped to a value safe on every generation (v5e/v6e 128 MiB physical, v7x 64 MiB/TC).
    itm = cdt.itemsize
    x_blk = b_tile * 49 * C * itm
    out_blk = b_tile * ncls_pad * 4
    w_bytes = (C * 128 + 512 * 768 + 768 * ncls_pad) * itm + (2 * 128 + ncls_pad) * 4
    vmem_limit = int(2 * (x_blk + out_blk + w_bytes) + (8 << 20))
    vmem_limit = min(max(vmem_limit, 32 << 20), 64 << 20)

    out = pl.pallas_call(
        _aux_head_kernel,
        out_shape=jax.ShapeDtypeStruct((n_pad, ncls_pad), jnp.float32),
        grid=(n_pad // b_tile,),
        in_specs=[
            pl.BlockSpec((b_tile, 7, 7, C), lambda n: (n, 0, 0, 0)),   # batch tile
            pl.BlockSpec((C, 128), lambda n: (0, 0)),                  # conv1x1 weight
            pl.BlockSpec((1, 128), lambda n: (0, 0)),                  # BN scale (f32)
            pl.BlockSpec((1, 128), lambda n: (0, 0)),                  # BN shift (f32)
            pl.BlockSpec((512, 768), lambda n: (0, 0)),                # fused conv2x2 weight
            pl.BlockSpec((768, ncls_pad), lambda n: (0, 0)),           # classifier weight (padded)
            pl.BlockSpec((1, ncls_pad), lambda n: (0, 0)),             # classifier bias (padded)
        ],
        out_specs=pl.BlockSpec((b_tile, ncls_pad), lambda n: (n, 0)),
        compiler_params=pltpu.CompilerParams(
            dimension_semantics=("parallel",),
            vmem_limit_bytes=vmem_limit),
    )(x_nhwc, w1_mat, bn_scale, bn_shift, w2_mat, wc_mat, bc_mat)

    return out[:N, :num_classes]


def reference_forward(x, params, num_classes):
    """Pure-JAX NCHW reference mirroring the PyTorch forward (eval-mode BN), f32."""
    w1, gamma, beta, r_mean, r_var, w2, wc, bc = params
    h = jnp.maximum(x, 0.0)
    h = lax.reduce_window(h, 0.0, lax.add, (1, 1, 5, 5), (1, 1, 2, 2), "VALID") / 25.0
    h = lax.conv_general_dilated(h, w1, (1, 1), "VALID",
                                 dimension_numbers=("NCHW", "OIHW", "NCHW"))
    h = (h - r_mean[None, :, None, None]) / jnp.sqrt(r_var + EPS)[None, :, None, None]
    h = h * gamma[None, :, None, None] + beta[None, :, None, None]
    h = jnp.maximum(h, 0.0)
    h = lax.conv_general_dilated(h, w2, (1, 1), "VALID",
                                 dimension_numbers=("NCHW", "OIHW", "NCHW"))
    h = jnp.maximum(h, 0.0)
    h = h.reshape(h.shape[0], -1)       # (N, 768)
    return h @ wc.T + bc[None, :]


if __name__ == "__main__":
    N, C, H, W = 2, 4, 7, 7
    num_classes = 10

    key = jax.random.PRNGKey(0)
    ks = jax.random.split(key, 9)
    x = jax.random.normal(ks[0], (N, C, H, W), jnp.float32)
    w1 = 0.1 * jax.random.normal(ks[1], (128, C, 1, 1), jnp.float32)       # Conv2d(C,128,1)
    gamma = 1.0 + 0.1 * jax.random.normal(ks[2], (128,), jnp.float32)      # BN weight
    beta = 0.1 * jax.random.normal(ks[3], (128,), jnp.float32)             # BN bias
    r_mean = 0.1 * jax.random.normal(ks[4], (128,), jnp.float32)           # BN running_mean
    r_var = jax.random.uniform(ks[5], (128,), jnp.float32, minval=0.5, maxval=1.5)
    w2 = 0.05 * jax.random.normal(ks[6], (768, 128, 2, 2), jnp.float32)    # Conv2d(128,768,2)
    wc = 0.05 * jax.random.normal(ks[7], (num_classes, 768), jnp.float32)  # Linear weight
    bc = 0.1 * jax.random.normal(ks[8], (num_classes,), jnp.float32)       # Linear bias
    params = (w1, gamma, beta, r_mean, r_var, w2, wc, bc)

    ref = jax.block_until_ready(reference_forward(x, params, num_classes))

    # f32 compute path: tight tolerance against the f32 reference.
    out_f32 = jax.block_until_ready(
        aux_head_forward(x, params, num_classes, compute_dtype=jnp.float32))
    assert out_f32.shape == (N, num_classes)
    assert jnp.allclose(out_f32, ref, atol=1e-4, rtol=1e-4), (out_f32, ref)

    # bf16 MXU path (default; recommended on v6e/v7x): looser tolerance vs the f32 reference.
    out_bf16 = jax.block_until_ready(aux_head_forward(x, params, num_classes))
    assert out_bf16.shape == (N, num_classes)
    assert jnp.allclose(out_bf16, ref, atol=2e-2, rtol=2e-2), (out_bf16, ref)

    print("KERNEL_OK")
</pallas_src>

<mosaic_0001>
module attributes {stable_mosaic.version = 11 : i64} {
  func.func @_aux_head_kernel(%arg0: i32, %arg1: memref<2x7x7x4xf32, #tpu.memory_space<vmem>>, %arg2: memref<4x128xf32, #tpu.memory_space<vmem>>, %arg3: memref<1x128xf32, #tpu.memory_space<vmem>>, %arg4: memref<1x128xf32, #tpu.memory_space<vmem>>, %arg5: memref<512x768xf32, #tpu.memory_space<vmem>>, %arg6: memref<768x128xf32, #tpu.memory_space<vmem>>, %arg7: memref<1x128xf32, #tpu.memory_space<vmem>>, %arg8: memref<2x128xf32, #tpu.memory_space<vmem>>) attributes {dimension_semantics = [#tpu.dimension_semantics<parallel>], iteration_bounds = array<i64: 1>, scalar_prefetch = 0 : i64, scratch_operands = 0 : i64, tpu.core_type = #tpu.core_type<tc>, window_params = [{transform_indices = @transform_0, window_bounds = array<i64: 2, 7, 7, 4>}, {pipeline_mode = #tpu.pipeline_mode<synchronous>, transform_indices = @transform_1, window_bounds = array<i64: 4, 128>}, {pipeline_mode = #tpu.pipeline_mode<synchronous>, transform_indices = @transform_2, window_bounds = array<i64: 1, 128>}, {pipeline_mode = #tpu.pipeline_mode<synchronous>, transform_indices = @transform_3, window_bounds = array<i64: 1, 128>}, {pipeline_mode = #tpu.pipeline_mode<synchronous>, transform_indices = @transform_4, window_bounds = array<i64: 512, 768>}, {pipeline_mode = #tpu.pipeline_mode<synchronous>, transform_indices = @transform_5, window_bounds = array<i64: 768, 128>}, {pipeline_mode = #tpu.pipeline_mode<synchronous>, transform_indices = @transform_6, window_bounds = array<i64: 1, 128>}, {transform_indices = @transform_7, window_bounds = array<i64: 2, 128>}]} {
    %c0 = arith.constant 0 : index
    %c0_0 = arith.constant 0 : index
    %c0_1 = arith.constant 0 : index
    %c0_2 = arith.constant 0 : index
    %0 = vector.load %arg1[%c0, %c0_0, %c0_1, %c0_2] : memref<2x7x7x4xf32, #tpu.memory_space<vmem>>, vector<2x7x7x4xf32>
    %cst = arith.constant 0.000000e+00 : f32
    %1 = vector.broadcast %cst : f32 to vector<2x7x7x4xf32>
    %2 = arith.maximumf %0, %1 : vector<2x7x7x4xf32>
    %3 = vector.extract_strided_slice %2 {offsets = [0, 0, 0, 0], sizes = [2, 5, 5, 4], strides = [1, 1, 1, 1]} : vector<2x7x7x4xf32> to vector<2x5x5x4xf32>
    %cst_3 = arith.constant dense<0.000000e+00> : vector<2x5x4xf32>
    %4 = vector.multi_reduction <add>, %3, %cst_3 [1] : vector<2x5x5x4xf32> to vector<2x5x4xf32>
    %cst_4 = arith.constant dense<0.000000e+00> : vector<2x4xf32>
    %5 = vector.multi_reduction <add>, %4, %cst_4 [1] : vector<2x5x4xf32> to vector<2x4xf32>
    %cst_5 = arith.constant 4.000000e-02 : f32
    %6 = vector.broadcast %cst_5 : f32 to vector<2x4xf32>
    %7 = arith.mulf %5, %6 : vector<2x4xf32>
    %8 = vector.extract_strided_slice %2 {offsets = [0, 0, 2, 0], sizes = [2, 5, 5, 4], strides = [1, 1, 1, 1]} : vector<2x7x7x4xf32> to vector<2x5x5x4xf32>
    %cst_6 = arith.constant dense<0.000000e+00> : vector<2x5x4xf32>
    %9 = vector.multi_reduction <add>, %8, %cst_6 [1] : vector<2x5x5x4xf32> to vector<2x5x4xf32>
    %cst_7 = arith.constant dense<0.000000e+00> : vector<2x4xf32>
    %10 = vector.multi_reduction <add>, %9, %cst_7 [1] : vector<2x5x4xf32> to vector<2x4xf32>
    %cst_8 = arith.constant 4.000000e-02 : f32
    %11 = vector.broadcast %cst_8 : f32 to vector<2x4xf32>
    %12 = arith.mulf %10, %11 : vector<2x4xf32>
    %13 = vector.extract_strided_slice %2 {offsets = [0, 2, 0, 0], sizes = [2, 5, 5, 4], strides = [1, 1, 1, 1]} : vector<2x7x7x4xf32> to vector<2x5x5x4xf32>
    %cst_9 = arith.constant dense<0.000000e+00> : vector<2x5x4xf32>
    %14 = vector.multi_reduction <add>, %13, %cst_9 [1] : vector<2x5x5x4xf32> to vector<2x5x4xf32>
    %cst_10 = arith.constant dense<0.000000e+00> : vector<2x4xf32>
    %15 = vector.multi_reduction <add>, %14, %cst_10 [1] : vector<2x5x4xf32> to vector<2x4xf32>
    %cst_11 = arith.constant 4.000000e-02 : f32
    %16 = vector.broadcast %cst_11 : f32 to vector<2x4xf32>
    %17 = arith.mulf %15, %16 : vector<2x4xf32>
    %18 = vector.extract_strided_slice %2 {offsets = [0, 2, 2, 0], sizes = [2, 5, 5, 4], strides = [1, 1, 1, 1]} : vector<2x7x7x4xf32> to vector<2x5x5x4xf32>
    %cst_12 = arith.constant dense<0.000000e+00> : vector<2x5x4xf32>
    %19 = vector.multi_reduction <add>, %18, %cst_12 [1] : vector<2x5x5x4xf32> to vector<2x5x4xf32>
    %cst_13 = arith.constant dense<0.000000e+00> : vector<2x4xf32>
    %20 = vector.multi_reduction <add>, %19, %cst_13 [1] : vector<2x5x4xf32> to vector<2x4xf32>
    %cst_14 = arith.constant 4.000000e-02 : f32
    %21 = vector.broadcast %cst_14 : f32 to vector<2x4xf32>
    %22 = arith.mulf %20, %21 : vector<2x4xf32>
    %23 = tpu.concatenate %7, %12, %17, %22 in 0 : vector<2x4xf32>, vector<2x4xf32>, vector<2x4xf32>, vector<2x4xf32> -> vector<8x4xf32>
    %c0_15 = arith.constant 0 : index
    %c0_16 = arith.constant 0 : index
    %24 = vector.load %arg2[%c0_15, %c0_16] : memref<4x128xf32, #tpu.memory_space<vmem>>, vector<4x128xf32>
    %cst_17 = arith.constant dense<0.000000e+00> : vector<8x128xf32>
    %25 = tpu.matmul %23, %24, %cst_17 {dimension_numbers = #tpu.dot_dimension_numbers<[1], [0], [0], [1], [0, 0, 1, 1], [], []>} : vector<8x4xf32>, vector<4x128xf32>, vector<8x128xf32> -> vector<8x128xf32>
    %c0_18 = arith.constant 0 : index
    %c0_19 = arith.constant 0 : index
    %26 = vector.load %arg3[%c0_18, %c0_19] : memref<1x128xf32, #tpu.memory_space<vmem>>, vector<1x128xf32>
    %27 = vector.broadcast %26 : vector<1x128xf32> to vector<8x128xf32>
    %28 = arith.mulf %25, %27 : vector<8x128xf32>
    %c0_20 = arith.constant 0 : index
    %c0_21 = arith.constant 0 : index
    %29 = vector.load %arg4[%c0_20, %c0_21] : memref<1x128xf32, #tpu.memory_space<vmem>>, vector<1x128xf32>
    %30 = vector.broadcast %29 : vector<1x128xf32> to vector<8x128xf32>
    %31 = arith.addf %28, %30 : vector<8x128xf32>
    %cst_22 = arith.constant 0.000000e+00 : f32
    %32 = vector.broadcast %cst_22 : f32 to vector<8x128xf32>
    %33 = arith.maximumf %31, %32 : vector<8x128xf32>
    %34 = vector.extract_strided_slice %33 {offsets = [0, 0], sizes = [2, 128], strides = [1, 1]} : vector<8x128xf32> to vector<2x128xf32>
    %35 = vector.extract_strided_slice %33 {offsets = [2, 0], sizes = [2, 128], strides = [1, 1]} : vector<8x128xf32> to vector<2x128xf32>
    %36 = vector.extract_strided_slice %33 {offsets = [4, 0], sizes = [2, 128], strides = [1, 1]} : vector<8x128xf32> to vector<2x128xf32>
    %37 = vector.extract_strided_slice %33 {offsets = [6, 0], sizes = [2, 128], strides = [1, 1]} : vector<8x128xf32> to vector<2x128xf32>
    %38 = tpu.concatenate %34, %35, %36, %37 in 1 : vector<2x128xf32>, vector<2x128xf32>, vector<2x128xf32>, vector<2x128xf32> -> vector<2x512xf32>
    %c0_23 = arith.constant 0 : index
    %c0_24 = arith.constant 0 : index
    %39 = vector.load %arg5[%c0_23, %c0_24] : memref<512x768xf32, #tpu.memory_space<vmem>>, vector<512x768xf32>
    %cst_25 = arith.constant dense<0.000000e+00> : vector<2x768xf32>
    %40 = tpu.matmul %38, %39, %cst_25 {dimension_numbers = #tpu.dot_dimension_numbers<[1], [0], [0], [1], [0, 0, 1, 1], [], []>} : vector<2x512xf32>, vector<512x768xf32>, vector<2x768xf32> -> vector<2x768xf32>
    %cst_26 = arith.constant 0.000000e+00 : f32
    %41 = vector.broadcast %cst_26 : f32 to vector<2x768xf32>
    %42 = arith.maximumf %40, %41 : vector<2x768xf32>
    %c0_27 = arith.constant 0 : index
    %c0_28 = arith.constant 0 : index
    %43 = vector.load %arg6[%c0_27, %c0_28] : memref<768x128xf32, #tpu.memory_space<vmem>>, vector<768x128xf32>
    %cst_29 = arith.constant dense<0.000000e+00> : vector<2x128xf32>
    %44 = tpu.matmul %42, %43, %cst_29 {dimension_numbers = #tpu.dot_dimension_numbers<[1], [0], [0], [1], [0, 0, 1, 1], [], []>} : vector<2x768xf32>, vector<768x128xf32>, vector<2x128xf32> -> vector<2x128xf32>
    %c0_30 = arith.constant 0 : index
    %c0_31 = arith.constant 0 : index
    %45 = vector.load %arg7[%c0_30, %c0_31] : memref<1x128xf32, #tpu.memory_space<vmem>>, vector<1x128xf32>
    %46 = vector.broadcast %45 : vector<1x128xf32> to vector<2x128xf32>
    %47 = arith.addf %44, %46 : vector<2x128xf32>
    %c0_32 = arith.constant 0 : index
    %c0_33 = arith.constant 0 : index
    %48 = vector.load %arg8[%c0_32, %c0_33] : memref<2x128xf32, #tpu.memory_space<vmem>>, vector<2x128xf32>
    tpu.vector_store %arg8[%c0_32, %c0_33], %47 {strides = array<i32>} : memref<2x128xf32, #tpu.memory_space<vmem>>, vector<2x128xf32>,
    return
  }
  func.func @transform_0(%arg0: i32) -> (i32, i32, i32, i32) {
    %c0_i32 = arith.constant 0 : i32
    %c0_i32_0 = arith.constant 0 : i32
    %c0_i32_1 = arith.constant 0 : i32
    %c0_i32_2 = arith.constant 0 : i32
    return %arg0, %c0_i32, %c0_i32_0, %c0_i32_1 : i32, i32, i32, i32
  }
  func.func @transform_1(%arg0: i32) -> (i32, i32) {
    %c0_i32 = arith.constant 0 : i32
    %c0_i32_0 = arith.constant 0 : i32
    %c0_i32_1 = arith.constant 0 : i32
    return %c0_i32, %c0_i32_0 : i32, i32
  }
  func.func @transform_2(%arg0: i32) -> (i32, i32) {
    %c0_i32 = arith.constant 0 : i32
    %c0_i32_0 = arith.constant 0 : i32
    %c0_i32_1 = arith.constant 0 : i32
    return %c0_i32, %c0_i32_0 : i32, i32
  }
  func.func @transform_3(%arg0: i32) -> (i32, i32) {
    %c0_i32 = arith.constant 0 : i32
    %c0_i32_0 = arith.constant 0 : i32
    %c0_i32_1 = arith.constant 0 : i32
    return %c0_i32, %c0_i32_0 : i32, i32
  }
  func.func @transform_4(%arg0: i32) -> (i32, i32) {
    %c0_i32 = arith.constant 0 : i32
    %c0_i32_0 = arith.constant 0 : i32
    %c0_i32_1 = arith.constant 0 : i32
    return %c0_i32, %c0_i32_0 : i32, i32
  }
  func.func @transform_5(%arg0: i32) -> (i32, i32) {
    %c0_i32 = arith.constant 0 : i32
    %c0_i32_0 = arith.constant 0 : i32
    %c0_i32_1 = arith.constant 0 : i32
    return %c0_i32, %c0_i32_0 : i32, i32
  }
  func.func @transform_6(%arg0: i32) -> (i32, i32) {
    %c0_i32 = arith.constant 0 : i32
    %c0_i32_0 = arith.constant 0 : i32
    %c0_i32_1 = arith.constant 0 : i32
    return %c0_i32, %c0_i32_0 : i32, i32
  }
  func.func @transform_7(%arg0: i32) -> (i32, i32) {
    %c0_i32 = arith.constant 0 : i32
    %c0_i32_0 = arith.constant 0 : i32
    return %arg0, %c0_i32 : i32, i32
  }
}

</mosaic_0001>

<llo_original>
// kernel: tpu_custom_call.1
$region0: #{tpu_custom_call.1}
  #allocation0 [shape = 'u32[]', space=smem, size = 0x4, offset = 0x4, fixed_abs, tag = 'smem constant byte address 0x4 - core index']
  #allocation1 [shape = 'u32[144,128]{1,0:T(1,128)}', space=vmem, size = 0x12000, scoped, tag = 'internal scratch']
  %s0 = inlined_call_operand.vmem [shape: f32[2,7,7,4], index: 0, kind: input, shape index: {}]
  %s1 = inlined_call_operand.hbm [shape: f32[4,128], index: 1, kind: input, shape index: {}]
  %s2 = inlined_call_operand.hbm [shape: f32[1,128], index: 2, kind: input, shape index: {}]
  %s3 = inlined_call_operand.hbm [shape: f32[1,128], index: 3, kind: input, shape index: {}]
  %s4 = inlined_call_operand.hbm [shape: f32[512,768], index: 4, kind: input, shape index: {}]
  %s5 = inlined_call_operand.hbm [shape: f32[768,128], index: 5, kind: input, shape index: {}]
  %s6 = inlined_call_operand.hbm [shape: f32[1,128], index: 6, kind: input, shape index: {}]
  %s7 = inlined_call_operand.hbm [shape: f32[2,128], index: 7, kind: output, shape index: {}]
  %s8 = sld [smem:[#allocation0]]
  $region62: #{tpu_custom_call.1} parent=0
    _
  %s10 = ssub.s32 1, %s8
  %s11 = scalar_select 0, %s10, %s8
  $region1: #{tpu_custom_call.1} parent=0
    #allocation2 [shape = 'u8[2048]{0}', space=vmem, size = 0x800, scoped, tag = 'input window, operand 1, single buffered']
    #allocation3 [shape = 's32[1]{0}', space=sflag, size = 0x4, scoped, tag = 'scoped memory for tpu_custom_call.1']
    #allocation4 [shape = 's32[1]{0}', space=sflag, size = 0x4, scoped, tag = 'scoped memory for tpu_custom_call.1']
    #allocation5 [shape = 'u8[512]{0}', space=vmem, size = 0x400, scoped, tag = 'input window, operand 2, single buffered']
    #allocation6 [shape = 's32[1]{0}', space=sflag, size = 0x4, scoped, tag = 'scoped memory for tpu_custom_call.1']
    #allocation7 [shape = 'u8[512]{0}', space=vmem, size = 0x400, scoped, tag = 'input window, operand 3, single buffered']
    #allocation8 [shape = 'u8[1572864]{0}', space=vmem, size = 0x180000, scoped, tag = 'input window, operand 4, single buffered']
    #allocation9 [shape = 's32[1]{0}', space=sflag, size = 0x4, scoped, tag = 'scoped memory for tpu_custom_call.1']
    #allocation10 [shape = 'u8[393216]{0}', space=vmem, size = 0x60000, scoped, tag = 'input window, operand 5, single buffered']
    #allocation11 [shape = 'u8[512]{0}', space=vmem, size = 0x400, scoped, tag = 'input window, operand 6, single buffered']
    #allocation12 [shape = 's32[1]{0}', space=sflag, size = 0x4, scoped, tag = 'scoped memory for tpu_custom_call.1']
    #allocation13 [shape = 'u8[1024]{0}', space=vmem, size = 0x400, scoped, tag = 'output window, operand 0, single buffered']
    %12 = vsyncpa [#allocation3], 0
    %13 = vsyncpa [#allocation6], 0
    %14 = vsyncpa [#allocation9], 0
    %15 = vsyncpa [#allocation12], 0
    %16 = vsyncpa [#allocation4], 0
    // Predicated region
    $region2: #{tpu_custom_call.1} parent=1 // pred_check
      _
    $region3: #{tpu_custom_call.1} parent=1 // pred_check_branch
      %18 = sbr.rel (0) target = $region5
    $region4: #{tpu_custom_call.1} parent=1 // pred_region
      _
    $region5: #{tpu_custom_call.1} parent=1 // pred_fallthru
      _
    // Predicated region
    $region6: #{tpu_custom_call.1} parent=1 // pred_check
      _
    $region7: #{tpu_custom_call.1} parent=1 // pred_check_branch
      %20 = sbr.rel (0) target = $region9
    $region8: #{tpu_custom_call.1} parent=1 // pred_region
      %s22 = ssub.s32 64, 64
      %23 = vsyncadd [#allocation3], %s22
      %s25 = sshll.u32 [#allocation2], 4
      %s26 = int_to_ptr.vmem [resolvable:$true] %s25
      %28 = dma.hbm_to_vmem [thread:$0]  %s1, 64, %s26, [#allocation3]
    $region9: #{tpu_custom_call.1} parent=1 // pred_fallthru
      _
    // Predicated region
    $region10: #{tpu_custom_call.1} parent=1 // pred_check
      _
    $region11: #{tpu_custom_call.1} parent=1 // pred_check_branch
      %30 = sbr.rel (0) target = $region13
    $region12: #{tpu_custom_call.1} parent=1 // pred_region
      %s32 = ssub.s32 16, 16
      %33 = vsyncadd [#allocation6], %s32
      %s35 = sshll.u32 [#allocation5], 4
      %s36 = int_to_ptr.vmem [resolvable:$true] %s35
      %38 = dma.hbm_to_vmem [thread:$0]  %s2, 16, %s36, [#allocation6]
    $region13: #{tpu_custom_call.1} parent=1 // pred_fallthru
      _
    // Predicated region
    $region14: #{tpu_custom_call.1} parent=1 // pred_check
      _
    $region15: #{tpu_custom_call.1} parent=1 // pred_check_branch
      %40 = sbr.rel (0) target = $region17
    $region16: #{tpu_custom_call.1} parent=1 // pred_region
      %s42 = ssub.s32 16, 16
      %43 = vsyncadd [#allocation6], %s42
      %s45 = sshll.u32 [#allocation7], 4
      %s46 = int_to_ptr.vmem [resolvable:$true] %s45
      %48 = dma.hbm_to_vmem [thread:$0]  %s3, 16, %s46, [#allocation6]
    $region17: #{tpu_custom_call.1} parent=1 // pred_fallthru
      _
    // Predicated region
    $region18: #{tpu_custom_call.1} parent=1 // pred_check
      _
    $region19: #{tpu_custom_call.1} parent=1 // pred_check_branch
      %50 = sbr.rel (0) target = $region21
    $region20: #{tpu_custom_call.1} parent=1 // pred_region
      %s52 = ssub.s32 49152, 49152
      %53 = vsyncadd [#allocation9], %s52
      %s54 = sshll.u32 [#allocation8], 4
      %s55 = int_to_ptr.vmem [resolvable:$true] %s54
      %60 = dma.hbm_to_vmem [thread:$0]  %s4, 49152, %s55, [#allocation9], 768, 768, 48
    $region21: #{tpu_custom_call.1} parent=1 // pred_fallthru
      _
    // Predicated region
    $region22: #{tpu_custom_call.1} parent=1 // pred_check
      _
    $region23: #{tpu_custom_call.1} parent=1 // pred_check_branch
      %62 = sbr.rel (0) target = $region25
    $region24: #{tpu_custom_call.1} parent=1 // pred_region
      %s64 = ssub.s32 12288, 12288
      %65 = vsyncadd [#allocation9], %s64
      %s66 = sshll.u32 [#allocation10], 4
      %s67 = int_to_ptr.vmem [resolvable:$true] %s66
      %72 = dma.hbm_to_vmem [thread:$0]  %s5, 12288, %s67, [#allocation9], 128, 128, 8
    $region25: #{tpu_custom_call.1} parent=1 // pred_fallthru
      _
    // Predicated region
    $region26: #{tpu_custom_call.1} parent=1 // pred_check
      _
    $region27: #{tpu_custom_call.1} parent=1 // pred_check_branch
      %74 = sbr.rel (0) target = $region29
    $region28: #{tpu_custom_call.1} parent=1 // pred_region
      %s76 = ssub.s32 16, 16
      %77 = vsyncadd [#allocation12], %s76
      %s79 = sshll.u32 [#allocation11], 4
      %s80 = int_to_ptr.vmem [resolvable:$true] %s79
      %82 = dma.hbm_to_vmem [thread:$0]  %s6, 16, %s80, [#allocation12]
    $region29: #{tpu_custom_call.1} parent=1 // pred_fallthru
      _
    // Predicated region
    $region30: #{tpu_custom_call.1} parent=1 // pred_check
      _
    $region31: #{tpu_custom_call.1} parent=1 // pred_check_branch
      %84 = sbr.rel (0) target = $region33
    $region32: #{tpu_custom_call.1} parent=1 // pred_region
      %85 = dma.done [#allocation3], 64
    $region33: #{tpu_custom_call.1} parent=1 // pred_fallthru
      _
    // Predicated region
    $region34: #{tpu_custom_call.1} parent=1 // pred_check
      _
    $region35: #{tpu_custom_call.1} parent=1 // pred_check_branch
      %87 = sbr.rel (0) target = $region37
    $region36: #{tpu_custom_call.1} parent=1 // pred_region
      %88 = dma.done [#allocation6], 16
    $region37: #{tpu_custom_call.1} parent=1 // pred_fallthru
      _
    // Predicated region
    $region38: #{tpu_custom_call.1} parent=1 // pred_check
      _
    $region39: #{tpu_custom_call.1} parent=1 // pred_check_branch
      %90 = sbr.rel (0) target = $region41
    $region40: #{tpu_custom_call.1} parent=1 // pred_region
      %91 = dma.done [#allocation6], 16
    $region41: #{tpu_custom_call.1} parent=1 // pred_fallthru
      _
    // Predicated region
    $region42: #{tpu_custom_call.1} parent=1 // pred_check
      _
    $region43: #{tpu_custom_call.1} parent=1 // pred_check_branch
      %93 = sbr.rel (0) target = $region45
    $region44: #{tpu_custom_call.1} parent=1 // pred_region
      %94 = dma.done [#allocation9], 49152
    $region45: #{tpu_custom_call.1} parent=1 // pred_fallthru
      _
    // Predicated region
    $region46: #{tpu_custom_call.1} parent=1 // pred_check
      _
    $region47: #{tpu_custom_call.1} parent=1 // pred_check_branch
      %96 = sbr.rel (0) target = $region49
    $region48: #{tpu_custom_call.1} parent=1 // pred_region
      %97 = dma.done [#allocation9], 12288
    $region49: #{tpu_custom_call.1} parent=1 // pred_fallthru
      _
    // Predicated region
    $region50: #{tpu_custom_call.1} parent=1 // pred_check
      _
    $region51: #{tpu_custom_call.1} parent=1 // pred_check_branch
      %99 = sbr.rel (0) target = $region53
    $region52: #{tpu_custom_call.1} parent=1 // pred_region
      %100 = dma.done [#allocation12], 16
    $region53: #{tpu_custom_call.1} parent=1 // pred_fallthru
      _
    %v101 = vld [vmem:[%s0] sm:$0x7f]
    %v102 = vld [vmem:[%s0 + $0x8] sm:$0x7f]
    %v103 = vld [vmem:[%s0 + $0x10] sm:$0x7f]
    %v104 = vld [vmem:[%s0 + $0x18] sm:$0x7f]
    %v105 = vld [vmem:[%s0 + $0x20] sm:$0x7f]
    %v106 = vld [vmem:[%s0 + $0x28] sm:$0x7f]
    %v107 = vld [vmem:[%s0 + $0x30] sm:$0x7f]
    %v108 = vld [vmem:[%s0 + $0x38] sm:$0x7f]
    %v109 = vld [vmem:[%s0 + $0x40] sm:$0x7f]
    %v110 = vld [vmem:[%s0 + $0x48] sm:$0x7f]
    %v111 = vld [vmem:[%s0 + $0x50] sm:$0x7f]
    %v112 = vld [vmem:[%s0 + $0x58] sm:$0x7f]
    %v113 = vld [vmem:[%s0 + $0x60] sm:$0x7f]
    %v114 = vld [vmem:[%s0 + $0x68] sm:$0x7f]
    %v115 = vmax.f32 %v101, 0.0
    %v116 = vmax.f32 %v102, 0.0
    %v117 = vmax.f32 %v103, 0.0
    %v118 = vmax.f32 %v104, 0.0
    %v119 = vmax.f32 %v105, 0.0
    %v120 = vmax.f32 %v106, 0.0
    %v121 = vmax.f32 %v107, 0.0
    %v122 = vmax.f32 %v108, 0.0
    %v123 = vmax.f32 %v109, 0.0
    %v124 = vmax.f32 %v110, 0.0
    %v125 = vmax.f32 %v111, 0.0
    %v126 = vmax.f32 %v112, 0.0
    %v127 = vmax.f32 %v113, 0.0
    %v128 = vmax.f32 %v114, 0.0
    %vm129 = vcmask 28672
    %v130 = vsel %vm129, %v115, 0.0
    %v131 = vsel %vm129, %v116, 0.0
    %v132 = vadd.f32 %v130, %v131
    %v133 = vsel %vm129, %v117, 0.0
    %v134 = vadd.f32 %v132, %v133
    %v135 = vsel %vm129, %v118, 0.0
    %v136 = vadd.f32 %v134, %v135
    %v137 = vsel %vm129, %v119, 0.0
    %v138 = vadd.f32 %v136, %v137
    %v139 = vsel %vm129, %v122, 0.0
    %v140 = vsel %vm129, %v123, 0.0
    %v141 = vadd.f32 %v139, %v140
    %v142 = vsel %vm129, %v124, 0.0
    %v143 = vadd.f32 %v141, %v142
    %v144 = vsel %vm129, %v125, 0.0
    %v145 = vadd.f32 %v143, %v144
    %v146 = vsel %vm129, %v126, 0.0
    %v147 = vadd.f32 %v145, %v146
    %v148 = vsel %vm129, %v138, 0.0
    %v149 = vrot.slane %v148, 4
    %v150 = vadd.f32 %v148, %v149
    %v151 = vrot.slane %v150, 2
    %v152 = vadd.f32 %v150, %v151
    %v153 = vrot.slane %v152, 1
    %v154 = vadd.f32 %v152, %v153
    %v155 = vsel %vm129, %v147, 0.0
    %v156 = vrot.slane %v155, 4
    %v157 = vadd.f32 %v155, %v156
    %v158 = vrot.slane %v157, 2
    %v159 = vadd.f32 %v157, %v158
    %v160 = vrot.slane %v159, 1
    %v161 = vadd.f32 %v159, %v160
    %v162 = vmul.f32 %v154, 0.04
    %v163 = vmul.f32 %v161, 0.04
    %vm164 = vcmask 30722
    %v165 = vsel %vm164, %v115, 0.0
    %v166 = vsel %vm164, %v116, 0.0
    %v167 = vadd.f32 %v165, %v166
    %v168 = vsel %vm164, %v117, 0.0
    %v169 = vadd.f32 %v167, %v168
    %v170 = vsel %vm164, %v118, 0.0
    %v171 = vadd.f32 %v169, %v170
    %v172 = vsel %vm164, %v119, 0.0
    %v173 = vadd.f32 %v171, %v172
    %v174 = vsel %vm164, %v122, 0.0
    %v175 = vsel %vm164, %v123, 0.0
    %v176 = vadd.f32 %v174, %v175
    %v177 = vsel %vm164, %v124, 0.0
    %v178 = vadd.f32 %v176, %v177
    %v179 = vsel %vm164, %v125, 0.0
    %v180 = vadd.f32 %v178, %v179
    %v181 = vsel %vm164, %v126, 0.0
    %v182 = vadd.f32 %v180, %v181
    %v185 = vrot.slane %v173, 2
    %v186 = vrot.slane %v182, 2
    %v189 = vsel %vm129, %v185, 0.0
    %v190 = vrot.slane %v189, 4
    %v191 = vadd.f32 %v189, %v190
    %v192 = vrot.slane %v191, 2
    %v193 = vadd.f32 %v191, %v192
    %v194 = vrot.slane %v193, 1
    %v195 = vadd.f32 %v193, %v194
    %v196 = vsel %vm129, %v186, 0.0
    %v197 = vrot.slane %v196, 4
    %v198 = vadd.f32 %v196, %v197
    %v199 = vrot.slane %v198, 2
    %v200 = vadd.f32 %v198, %v199
    %v201 = vrot.slane %v200, 1
    %v202 = vadd.f32 %v200, %v201
    %v203 = vmul.f32 %v195, 0.04
    %v204 = vmul.f32 %v202, 0.04
    %v205 = vadd.f32 %v133, %v135
    %v206 = vadd.f32 %v205, %v137
    %v207 = vsel %vm129, %v120, 0.0
    %v208 = vadd.f32 %v206, %v207
    %v209 = vsel %vm129, %v121, 0.0
    %v210 = vadd.f32 %v208, %v209
    %v211 = vadd.f32 %v142, %v144
    %v212 = vadd.f32 %v211, %v146
    %v213 = vsel %vm129, %v127, 0.0
    %v214 = vadd.f32 %v212, %v213
    %v215 = vsel %vm129, %v128, 0.0
    %v216 = vadd.f32 %v214, %v215
    %v217 = vsel %vm129, %v210, 0.0
    %v218 = vrot.slane %v217, 4
    %v219 = vadd.f32 %v217, %v218
    %v220 = vrot.slane %v219, 2
    %v221 = vadd.f32 %v219, %v220
    %v222 = vrot.slane %v221, 1
    %v223 = vadd.f32 %v221, %v222
    %v224 = vsel %vm129, %v216, 0.0
    %v225 = vrot.slane %v224, 4
    %v226 = vadd.f32 %v224, %v225
    %v227 = vrot.slane %v226, 2
    %v228 = vadd.f32 %v226, %v227
    %v229 = vrot.slane %v228, 1
    %v230 = vadd.f32 %v228, %v229
    %v231 = vmul.f32 %v223, 0.04
    %v232 = vmul.f32 %v230, 0.04
    %v233 = vadd.f32 %v168, %v170
    %v234 = vadd.f32 %v233, %v172
    %v235 = vsel %vm164, %v120, 0.0
    %v236 = vadd.f32 %v234, %v235
    %v237 = vsel %vm164, %v121, 0.0
    %v238 = vadd.f32 %v236, %v237
    %v239 = vadd.f32 %v177, %v179
    %v240 = vadd.f32 %v239, %v181
    %v241 = vsel %vm164, %v127, 0.0
    %v242 = vadd.f32 %v240, %v241
    %v243 = vsel %vm164, %v128, 0.0
    %v244 = vadd.f32 %v242, %v243
    %v247 = vrot.slane %v238, 2
    %v248 = vrot.slane %v244, 2
    %v251 = vsel %vm129, %v247, 0.0
    %v252 = vrot.slane %v251, 4
    %v253 = vadd.f32 %v251, %v252
    %v254 = vrot.slane %v253, 2
    %v255 = vadd.f32 %v253, %v254
    %v256 = vrot.slane %v255, 1
    %v257 = vadd.f32 %v255, %v256
    %v258 = vsel %vm129, %v248, 0.0
    %v259 = vrot.slane %v258, 4
    %v260 = vadd.f32 %v258, %v259
    %v261 = vrot.slane %v260, 2
    %v262 = vadd.f32 %v260, %v261
    %v263 = vrot.slane %v262, 1
    %v264 = vadd.f32 %v262, %v263
    %v265 = vmul.f32 %v257, 0.04
    %v266 = vmul.f32 %v264, 0.04
    %vm269 = vcmask 1041409
    %v270 = vsel %vm269, %v163, %v162
    %vm274 = vcmask 1043459
    %v275 = vsel %vm274, %v204, %v203
    %vm279 = vcmask 1045509
    %v280 = vsel %vm279, %v232, %v231
    %vm284 = vcmask 1047559
    %v285 = vsel %vm284, %v266, %v265
    %vm287 = vcmask 1041408
    %v288 = vsel %vm287, %v270, %v275
    %vm289 = vcmask 1043456
    %v290 = vsel %vm289, %v288, %v280
    %vm291 = vcmask 1045504
    %v292 = vsel %vm291, %v290, %v285
    %v293 = vld [vmem:[#allocation2] sm:$0xf]
    %vm294 = vcmask 31744
    %v296 = vsel %vm294, %v292, 0
    %v299 = vsel %vm289, %v293, 0
    %301 = vmatprep.subr.mxu0 0.0
    %302 = vmatpush1.msra.mxu0 %v299
    %303 = vmatprep.subr.mxu0 0.0
    %304 = vmatpush1.msra.mxu0 0.0
    %305 = vmatprep.subr.mxu0 0.0
    %306 = vmatpush1.msra.mxu0 0.0
    %307 = vmatprep.subr.mxu0 0.0
    %308 = vmatpush1.msra.mxu0 0.0
    %309 = vmatprep.subr.mxu0 0.0
    %310 = vmatpush1.msra.mxu0 0.0
    %311 = vmatprep.subr.mxu0 0.0
    %312 = vmatpush1.msra.mxu0 0.0
    %313 = vmatprep.subr.mxu0 0.0
    %314 = vmatpush1.msra.mxu0 0.0
    %315 = vmatprep.subr.mxu0 0.0
    %316 = vmatpush1.msra.mxu0 0.0
    %317 = vmatprep.subr.mxu0 0.0
    %318 = vmatpush1.msra.mxu0 0.0
    %319 = vmatprep.subr.mxu0 0.0
    %320 = vmatpush1.msra.mxu0 0.0
    %321 = vmatprep.subr.mxu0 0.0
    %322 = vmatpush1.msra.mxu0 0.0
    %323 = vmatprep.subr.mxu0 0.0
    %324 = vmatpush1.msra.mxu0 0.0
    %325 = vmatprep.subr.mxu0 0.0
    %326 = vmatpush1.msra.mxu0 0.0
    %327 = vmatprep.subr.mxu0 0.0
    %328 = vmatpush1.msra.mxu0 0.0
    %329 = vmatprep.subr.mxu0 0.0
    %330 = vmatpush1.msra.mxu0 0.0
    %331 = vmatprep.subr.mxu0 0.0
    %332 = vmatpush1.msra.mxu0 0.0
    %333 = vmatprep.subr.mxu0 0.0
    %334 = vmatpush1.msra.mxu0 0.0
    %335 = vmatprep.subr.mxu0 0.0
    %336 = vmatpush1.msra.mxu0 0.0
    %337 = vmatprep.subr.mxu0 0.0
    %338 = vmatpush1.msra.mxu0 0.0
    %339 = vmatprep.subr.mxu0 0.0
    %340 = vmatpush1.msra.mxu0 0.0
    %341 = vmatprep.subr.mxu0 0.0
    %342 = vmatpush1.msra.mxu0 0.0
    %343 = vmatprep.subr.mxu0 0.0
    %344 = vmatpush1.msra.mxu0 0.0
    %345 = vmatprep.subr.mxu0 0.0
    %346 = vmatpush1.msra.mxu0 0.0
    %347 = vmatprep.subr.mxu0 0.0
    %348 = vmatpush1.msra.mxu0 0.0
    %349 = vmatprep.subr.mxu0 0.0
    %350 = vmatpush1.msra.mxu0 0.0
    %351 = vmatprep.subr.mxu0 0.0
    %352 = vmatpush1.msra.mxu0 0.0
    %353 = vmatprep.subr.mxu0 0.0
    %354 = vmatpush1.msra.mxu0 0.0
    %355 = vmatprep.subr.mxu0 0.0
    %356 = vmatpush1.msra.mxu0 0.0
    %357 = vmatprep.subr.mxu0 0.0
    %358 = vmatpush1.msra.mxu0 0.0
    %359 = vmatprep.subr.mxu0 0.0
    %360 = vmatpush1.msra.mxu0 0.0
    %361 = vmatprep.subr.mxu0 0.0
    %362 = vmatpush1.msra.mxu0 0.0
    %363 = vmatprep.subr.mxu0 0.0
    %364 = vmatpush1.msra.mxu0 0.0
    %365 = vmatprep.mubr.f32.mxu0 0.0
    %366 = vmatmul.mubr.f32.gmra.mrb[0].mxu0 %v296
    %v367 = vpop.f32.mrb[0].mxu0
    %v368 = vadd.f32 0.0, %v367
    %v369 = vpop.f32.mrb[0].mxu0
    %370 = vdwg.mxu0
    %v371 = vld [vmem:[#allocation5] sm:$0x1]
    %v373 = vlaneseq
    %v374 = vshrl.u32 %v373, 7
    %v375 = vsub.s32 0, %v374
    %v376 = vrot.slane %v371, %v375
    %v378 = vmul.f32 %v368, %v376
    %v379 = vld [vmem:[#allocation7] sm:$0x1]
    %v381 = vlaneseq
    %v382 = vshrl.u32 %v381, 7
    %v383 = vsub.s32 0, %v382
    %v384 = vrot.slane %v379, %v383
    %v386 = vadd.f32 %v378, %v384
    %v387 = vmax.f32 %v386, 0.0
    %v389 = vrot.slane %v387, 2
    %v391 = vrot.slane %v387, 4
    %v393 = vrot.slane %v387, 6
    %v395 = vld [vmem:[#allocation8] sm:$0xff]
    %v396 = vld [vmem:[#allocation8 + $0x8] sm:$0xff]
    %v397 = vld [vmem:[#allocation8 + $0x10] sm:$0xff]
    %v398 = vld [vmem:[#allocation8 + $0x18] sm:$0xff]
    %v399 = vld [vmem:[#allocation8 + $0x20] sm:$0xff]
    %v400 = vld [vmem:[#allocation8 + $0x28] sm:$0xff]
    %v401 = vld [vmem:[#allocation8 + $0x30] sm:$0xff]
    %v402 = vld [vmem:[#allocation8 + $0x38] sm:$0xff]
    %v403 = vld [vmem:[#allocation8 + $0x40] sm:$0xff]
    %v404 = vld [vmem:[#allocation8 + $0x48] sm:$0xff]
    %v405 = vld [vmem:[#allocation8 + $0x50] sm:$0xff]
    %v406 = vld [vmem:[#allocation8 + $0x58] sm:$0xff]
    %v407 = vld [vmem:[#allocation8 + $0x60] sm:$0xff]
    %v408 = vld [vmem:[#allocation8 + $0x68] sm:$0xff]
    %v409 = vld [vmem:[#allocation8 + $0x70] sm:$0xff]
    %v410 = vld [vmem:[#allocation8 + $0x78] sm:$0xff]
    %v411 = vld [vmem:[#allocation8 + $0x80] sm:$0xff]
    %v412 = vld [vmem:[#allocation8 + $0x88] sm:$0xff]
    %v413 = vld [vmem:[#allocation8 + $0x90] sm:$0xff]
    %v414 = vld [vmem:[#allocation8 + $0x98] sm:$0xff]
    %v415 = vld [vmem:[#allocation8 + $0xa0] sm:$0xff]
    %v416 = vld [vmem:[#allocation8 + $0xa8] sm:$0xff]
    %v417 = vld [vmem:[#allocation8 + $0xb0] sm:$0xff]
    %v418 = vld [vmem:[#allocation8 + $0xb8] sm:$0xff]
    %v419 = vld [vmem:[#allocation8 + $0xc0] sm:$0xff]
    %v420 = vld [vmem:[#allocation8 + $0xc8] sm:$0xff]
    %v421 = vld [vmem:[#allocation8 + $0xd0] sm:$0xff]
    %v422 = vld [vmem:[#allocation8 + $0xd8] sm:$0xff]
    %v423 = vld [vmem:[#allocation8 + $0xe0] sm:$0xff]
    %v424 = vld [vmem:[#allocation8 + $0xe8] sm:$0xff]
    %v425 = vld [vmem:[#allocation8 + $0xf0] sm:$0xff]
    %v426 = vld [vmem:[#allocation8 + $0xf8] sm:$0xff]
    %v427 = vld [vmem:[#allocation8 + $0x100] sm:$0xff]
    %v428 = vld [vmem:[#allocation8 + $0x108] sm:$0xff]
    %v429 = vld [vmem:[#allocation8 + $0x110] sm:$0xff]
    %v430 = vld [vmem:[#allocation8 + $0x118] sm:$0xff]
    %v431 = vld [vmem:[#allocation8 + $0x120] sm:$0xff]
    %v432 = vld [vmem:[#allocation8 + $0x128] sm:$0xff]
    %v433 = vld [vmem:[#allocation8 + $0x130] sm:$0xff]
    %v434 = vld [vmem:[#allocation8 + $0x138] sm:$0xff]
    %v435 = vld [vmem:[#allocation8 + $0x140] sm:$0xff]
    %v436 = vld [vmem:[#allocation8 + $0x148] sm:$0xff]
    %v437 = vld [vmem:[#allocation8 + $0x150] sm:$0xff]
    %v438 = vld [vmem:[#allocation8 + $0x158] sm:$0xff]
    %v439 = vld [vmem:[#allocation8 + $0x160] sm:$0xff]
    %v440 = vld [vmem:[#allocation8 + $0x168] sm:$0xff]
    %v441 = vld [vmem:[#allocation8 + $0x170] sm:$0xff]
    %v442 = vld [vmem:[#allocation8 + $0x178] sm:$0xff]
    %v443 = vld [vmem:[#allocation8 + $0x180] sm:$0xff]
    %v444 = vld [vmem:[#allocation8 + $0x188] sm:$0xff]
    %v445 = vld [vmem:[#allocation8 + $0x190] sm:$0xff]
    %v446 = vld [vmem:[#allocation8 + $0x198] sm:$0xff]
    %v447 = vld [vmem:[#allocation8 + $0x1a0] sm:$0xff]
    %v448 = vld [vmem:[#allocation8 + $0x1a8] sm:$0xff]
    %v449 = vld [vmem:[#allocation8 + $0x1b0] sm:$0xff]
    %v450 = vld [vmem:[#allocation8 + $0x1b8] sm:$0xff]
    %v451 = vld [vmem:[#allocation8 + $0x1c0] sm:$0xff]
    %v452 = vld [vmem:[#allocation8 + $0x1c8] sm:$0xff]
    %v453 = vld [vmem:[#allocation8 + $0x1d0] sm:$0xff]
    %v454 = vld [vmem:[#allocation8 + $0x1d8] sm:$0xff]
    %v455 = vld [vmem:[#allocation8 + $0x1e0] sm:$0xff]
    %v456 = vld [vmem:[#allocation8 + $0x1e8] sm:$0xff]
    %v457 = vld [vmem:[#allocation8 + $0x1f0] sm:$0xff]
    %v458 = vld [vmem:[#allocation8 + $0x1f8] sm:$0xff]
    %v459 = vld [vmem:[#allocation8 + $0x200] sm:$0xff]
    %v460 = vld [vmem:[#allocation8 + $0x208] sm:$0xff]
    %v461 = vld [vmem:[#allocation8 + $0x210] sm:$0xff]
    %v462 = vld [vmem:[#allocation8 + $0x218] sm:$0xff]
    %v463 = vld [vmem:[#allocation8 + $0x220] sm:$0xff]
    %v464 = vld [vmem:[#allocation8 + $0x228] sm:$0xff]
    %v465 = vld [vmem:[#allocation8 + $0x230] sm:$0xff]
    %v466 = vld [vmem:[#allocation8 + $0x238] sm:$0xff]
    %v467 = vld [vmem:[#allocation8 + $0x240] sm:$0xff]
    %v468 = vld [vmem:[#allocation8 + $0x248] sm:$0xff]
    %v469 = vld [vmem:[#allocation8 + $0x250] sm:$0xff]
    %v470 = vld [vmem:[#allocation8 + $0x258] sm:$0xff]
    %v471 = vld [vmem:[#allocation8 + $0x260] sm:$0xff]
    %v472 = vld [vmem:[#allocation8 + $0x268] sm:$0xff]
    %v473 = vld [vmem:[#allocation8 + $0x270] sm:$0xff]
    %v474 = vld [vmem:[#allocation8 + $0x278] sm:$0xff]
    %v475 = vld [vmem:[#allocation8 + $0x280] sm:$0xff]
    %v476 = vld [vmem:[#allocation8 + $0x288] sm:$0xff]
    %v477 = vld [vmem:[#allocation8 + $0x290] sm:$0xff]
    %v478 = vld [vmem:[#allocation8 + $0x298] sm:$0xff]
    %v479 = vld [vmem:[#allocation8 + $0x2a0] sm:$0xff]
    %v480 = vld [vmem:[#allocation8 + $0x2a8] sm:$0xff]
    %v481 = vld [vmem:[#allocation8 + $0x2b0] sm:$0xff]
    %v482 = vld [vmem:[#allocation8 + $0x2b8] sm:$0xff]
    %v483 = vld [vmem:[#allocation8 + $0x2c0] sm:$0xff]
    %v484 = vld [vmem:[#allocation8 + $0x2c8] sm:$0xff]
    %v485 = vld [vmem:[#allocation8 + $0x2d0] sm:$0xff]
    %v486 = vld [vmem:[#allocation8 + $0x2d8] sm:$0xff]
    %v487 = vld [vmem:[#allocation8 + $0x2e0] sm:$0xff]
    %v488 = vld [vmem:[#allocation8 + $0x2e8] sm:$0xff]
    %v489 = vld [vmem:[#allocation8 + $0x2f0] sm:$0xff]
    %v490 = vld [vmem:[#allocation8 + $0x2f8] sm:$0xff]
    %v491 = vld [vmem:[#allocation8 + $0x300] sm:$0xff]
    %v492 = vld [vmem:[#allocation8 + $0x308] sm:$0xff]
    %v493 = vld [vmem:[#allocation8 + $0x310] sm:$0xff]
    %v494 = vld [vmem:[#allocation8 + $0x318] sm:$0xff]
    %v495 = vld [vmem:[#allocation8 + $0x320] sm:$0xff]
    %v496 = vld [vmem:[#allocation8 + $0x328] sm:$0xff]
    %v497 = vld [vmem:[#allocation8 + $0x330] sm:$0xff]
    %v498 = vld [vmem:[#allocation8 + $0x338] sm:$0xff]
    %v499 = vld [vmem:[#allocation8 + $0x340] sm:$0xff]
    %v500 = vld [vmem:[#allocation8 + $0x348] sm:$0xff]
    %v501 = vld [vmem:[#allocation8 + $0x350] sm:$0xff]
    %v502 = vld [vmem:[#allocation8 + $0x358] sm:$0xff]
    %v503 = vld [vmem:[#allocation8 + $0x360] sm:$0xff]
    %v504 = vld [vmem:[#allocation8 + $0x368] sm:$0xff]
    %v505 = vld [vmem:[#allocation8 + $0x370] sm:$0xff]
    %v506 = vld [vmem:[#allocation8 + $0x378] sm:$0xff]
    %v507 = vld [vmem:[#allocation8 + $0x380] sm:$0xff]
    %v508 = vld [vmem:[#allocation8 + $0x388] sm:$0xff]
    %v509 = vld [vmem:[#allocation8 + $0x390] sm:$0xff]
    %v510 = vld [vmem:[#allocation8 + $0x398] sm:$0xff]
    %v511 = vld [vmem:[#allocation8 + $0x3a0] sm:$0xff]
    %v512 = vld [vmem:[#allocation8 + $0x3a8] sm:$0xff]
    %v513 = vld [vmem:[#allocation8 + $0x3b0] sm:$0xff]
    %v514 = vld [vmem:[#allocation8 + $0x3b8] sm:$0xff]
    %v515 = vld [vmem:[#allocation8 + $0x3c0] sm:$0xff]
    %v516 = vld [vmem:[#allocation8 + $0x3c8] sm:$0xff]
    %v517 = vld [vmem:[#allocation8 + $0x3d0] sm:$0xff]
    %v518 = vld [vmem:[#allocation8 + $0x3d8] sm:$0xff]
    %v519 = vld [vmem:[#allocation8 + $0x3e0] sm:$0xff]
    %v520 = vld [vmem:[#allocation8 + $0x3e8] sm:$0xff]
    %v521 = vld [vmem:[#allocation8 + $0x3f0] sm:$0xff]
    %v522 = vld [vmem:[#allocation8 + $0x3f8] sm:$0xff]
    %v523 = vld [vmem:[#allocation8 + $0x400] sm:$0xff]
    %v524 = vld [vmem:[#allocation8 + $0x408] sm:$0xff]
    %v525 = vld [vmem:[#allocation8 + $0x410] sm:$0xff]
    %v526 = vld [vmem:[#allocation8 + $0x418] sm:$0xff]
    %v527 = vld [vmem:[#allocation8 + $0x420] sm:$0xff]
    %v528 = vld [vmem:[#allocation8 + $0x428] sm:$0xff]
    %v529 = vld [vmem:[#allocation8 + $0x430] sm:$0xff]
    %v530 = vld [vmem:[#allocation8 + $0x438] sm:$0xff]
    %v531 = vld [vmem:[#allocation8 + $0x440] sm:$0xff]
    %v532 = vld [vmem:[#allocation8 + $0x448] sm:$0xff]
    %v533 = vld [vmem:[#allocation8 + $0x450] sm:$0xff]
    %v534 = vld [vmem:[#allocation8 + $0x458] sm:$0xff]
    %v535 = vld [vmem:[#allocation8 + $0x460] sm:$0xff]
    %v536 = vld [vmem:[#allocation8 + $0x468] sm:$0xff]
    %v537 = vld [vmem:[#allocation8 + $0x470] sm:$0xff]
    %v538 = vld [vmem:[#allocation8 + $0x478] sm:$0xff]
    %v539 = vld [vmem:[#allocation8 + $0x480] sm:$0xff]
    %v540 = vld [vmem:[#allocation8 + $0x488] sm:$0xff]
    %v541 = vld [vmem:[#allocation8 + $0x490] sm:$0xff]
    %v542 = vld [vmem:[#allocation8 + $0x498] sm:$0xff]
    %v543 = vld [vmem:[#allocation8 + $0x4a0] sm:$0xff]
    %v544 = vld [vmem:[#allocation8 + $0x4a8] sm:$0xff]
    %v545 = vld [vmem:[#allocation8 + $0x4b0] sm:$0xff]
    %v546 = vld [vmem:[#allocation8 + $0x4b8] sm:$0xff]
    %v547 = vld [vmem:[#allocation8 + $0x4c0] sm:$0xff]
    %v548 = vld [vmem:[#allocation8 + $0x4c8] sm:$0xff]
    %v549 = vld [vmem:[#allocation8 + $0x4d0] sm:$0xff]
    %v550 = vld [vmem:[#allocation8 + $0x4d8] sm:$0xff]
    %v551 = vld [vmem:[#allocation8 + $0x4e0] sm:$0xff]
    %v552 = vld [vmem:[#allocation8 + $0x4e8] sm:$0xff]
    %v553 = vld [vmem:[#allocation8 + $0x4f0] sm:$0xff]
    %v554 = vld [vmem:[#allocation8 + $0x4f8] sm:$0xff]
    %v555 = vld [vmem:[#allocation8 + $0x500] sm:$0xff]
    %v556 = vld [vmem:[#allocation8 + $0x508] sm:$0xff]
    %v557 = vld [vmem:[#allocation8 + $0x510] sm:$0xff]
    %v558 = vld [vmem:[#allocation8 + $0x518] sm:$0xff]
    %v559 = vld [vmem:[#allocation8 + $0x520] sm:$0xff]
    %v560 = vld [vmem:[#allocation8 + $0x528] sm:$0xff]
    %v561 = vld [vmem:[#allocation8 + $0x530] sm:$0xff]
    %v562 = vld [vmem:[#allocation8 + $0x538] sm:$0xff]
    %v563 = vld [vmem:[#allocation8 + $0x540] sm:$0xff]
    %v564 = vld [vmem:[#allocation8 + $0x548] sm:$0xff]
    %v565 = vld [vmem:[#allocation8 + $0x550] sm:$0xff]
    %v566 = vld [vmem:[#allocation8 + $0x558] sm:$0xff]
    %v567 = vld [vmem:[#allocation8 + $0x560] sm:$0xff]
    %v568 = vld [vmem:[#allocation8 + $0x568] sm:$0xff]
    %v569 = vld [vmem:[#allocation8 + $0x570] sm:$0xff]
    %v570 = vld [vmem:[#allocation8 + $0x578] sm:$0xff]
    %v571 = vld [vmem:[#allocation8 + $0x580] sm:$0xff]
    %v572 = vld [vmem:[#allocation8 + $0x588] sm:$0xff]
    %v573 = vld [vmem:[#allocation8 + $0x590] sm:$0xff]
    %v574 = vld [vmem:[#allocation8 + $0x598] sm:$0xff]
    %v575 = vld [vmem:[#allocation8 + $0x5a0] sm:$0xff]
    %v576 = vld [vmem:[#allocation8 + $0x5a8] sm:$0xff]
    %v577 = vld [vmem:[#allocation8 + $0x5b0] sm:$0xff]
    %v578 = vld [vmem:[#allocation8 + $0x5b8] sm:$0xff]
    %v579 = vld [vmem:[#allocation8 + $0x5c0] sm:$0xff]
    %v580 = vld [vmem:[#allocation8 + $0x5c8] sm:$0xff]
    %v581 = vld [vmem:[#allocation8 + $0x5d0] sm:$0xff]
    %v582 = vld [vmem:[#allocation8 + $0x5d8] sm:$0xff]
    %v583 = vld [vmem:[#allocation8 + $0x5e0] sm:$0xff]
    %v584 = vld [vmem:[#allocation8 + $0x5e8] sm:$0xff]
    %v585 = vld [vmem:[#allocation8 + $0x5f0] sm:$0xff]
    %v586 = vld [vmem:[#allocation8 + $0x5f8] sm:$0xff]
    %v587 = vld [vmem:[#allocation8 + $0x600] sm:$0xff]
    %v588 = vld [vmem:[#allocation8 + $0x608] sm:$0xff]
    %v589 = vld [vmem:[#allocation8 + $0x610] sm:$0xff]
    %v590 = vld [vmem:[#allocation8 + $0x618] sm:$0xff]
    %v591 = vld [vmem:[#allocation8 + $0x620] sm:$0xff]
    %v592 = vld [vmem:[#allocation8 + $0x628] sm:$0xff]
    %v593 = vld [vmem:[#allocation8 + $0x630] sm:$0xff]
    %v594 = vld [vmem:[#allocation8 + $0x638] sm:$0xff]
    %v595 = vld [vmem:[#allocation8 + $0x640] sm:$0xff]
    %v596 = vld [vmem:[#allocation8 + $0x648] sm:$0xff]
    %v597 = vld [vmem:[#allocation8 + $0x650] sm:$0xff]
    %v598 = vld [vmem:[#allocation8 + $0x658] sm:$0xff]
    %v599 = vld [vmem:[#allocation8 + $0x660] sm:$0xff]
    %v600 = vld [vmem:[#allocation8 + $0x668] sm:$0xff]
    %v601 = vld [vmem:[#allocation8 + $0x670] sm:$0xff]
    %v602 = vld [vmem:[#allocation8 + $0x678] sm:$0xff]
    %v603 = vld [vmem:[#allocation8 + $0x680] sm:$0xff]
    %v604 = vld [vmem:[#allocation8 + $0x688] sm:$0xff]
    %v605 = vld [vmem:[#allocation8 + $0x690] sm:$0xff]
    %v606 = vld [vmem:[#allocation8 + $0x698] sm:$0xff]
    %v607 = vld [vmem:[#allocation8 + $0x6a0] sm:$0xff]
    %v608 = vld [vmem:[#allocation8 + $0x6a8] sm:$0xff]
    %v609 = vld [vmem:[#allocation8 + $0x6b0] sm:$0xff]
    %v610 = vld [vmem:[#allocation8 + $0x6b8] sm:$0xff]
    %v611 = vld [vmem:[#allocation8 + $0x6c0] sm:$0xff]
    %v612 = vld [vmem:[#allocation8 + $0x6c8] sm:$0xff]
    %v613 = vld [vmem:[#allocation8 + $0x6d0] sm:$0xff]
    %v614 = vld [vmem:[#allocation8 + $0x6d8] sm:$0xff]
    %v615 = vld [vmem:[#allocation8 + $0x6e0] sm:$0xff]
    %v616 = vld [vmem:[#allocation8 + $0x6e8] sm:$0xff]
    %v617 = vld [vmem:[#allocation8 + $0x6f0] sm:$0xff]
    %v618 = vld [vmem:[#allocation8 + $0x6f8] sm:$0xff]
    %v619 = vld [vmem:[#allocation8 + $0x700] sm:$0xff]
    %v620 = vld [vmem:[#allocation8 + $0x708] sm:$0xff]
    %v621 = vld [vmem:[#allocation8 + $0x710] sm:$0xff]
    %v622 = vld [vmem:[#allocation8 + $0x718] sm:$0xff]
    %v623 = vld [vmem:[#allocation8 + $0x720] sm:$0xff]
    %v624 = vld [vmem:[#allocation8 + $0x728] sm:$0xff]
    %v625 = vld [vmem:[#allocation8 + $0x730] sm:$0xff]
    %v626 = vld [vmem:[#allocation8 + $0x738] sm:$0xff]
    %v627 = vld [vmem:[#allocation8 + $0x740] sm:$0xff]
    %v628 = vld [vmem:[#allocation8 + $0x748] sm:$0xff]
    %v629 = vld [vmem:[#allocation8 + $0x750] sm:$0xff]
    %v630 = vld [vmem:[#allocation8 + $0x758] sm:$0xff]
    %v631 = vld [vmem:[#allocation8 + $0x760] sm:$0xff]
    %v632 = vld [vmem:[#allocation8 + $0x768] sm:$0xff]
    %v633 = vld [vmem:[#allocation8 + $0x770] sm:$0xff]
    %v634 = vld [vmem:[#allocation8 + $0x778] sm:$0xff]
    %v635 = vld [vmem:[#allocation8 + $0x780] sm:$0xff]
    %v636 = vld [vmem:[#allocation8 + $0x788] sm:$0xff]
    %v637 = vld [vmem:[#allocation8 + $0x790] sm:$0xff]
    %v638 = vld [vmem:[#allocation8 + $0x798] sm:$0xff]
    %v639 = vld [vmem:[#allocation8 + $0x7a0] sm:$0xff]
    %v640 = vld [vmem:[#allocation8 + $0x7a8] sm:$0xff]
    %v641 = vld [vmem:[#allocation8 + $0x7b0] sm:$0xff]
    %v642 = vld [vmem:[#allocation8 + $0x7b8] sm:$0xff]
    %v643 = vld [vmem:[#allocation8 + $0x7c0] sm:$0xff]
    %v644 = vld [vmem:[#allocation8 + $0x7c8] sm:$0xff]
    %v645 = vld [vmem:[#allocation8 + $0x7d0] sm:$0xff]
    %v646 = vld [vmem:[#allocation8 + $0x7d8] sm:$0xff]
    %v647 = vld [vmem:[#allocation8 + $0x7e0] sm:$0xff]
    %v648 = vld [vmem:[#allocation8 + $0x7e8] sm:$0xff]
    %v649 = vld [vmem:[#allocation8 + $0x7f0] sm:$0xff]
    %v650 = vld [vmem:[#allocation8 + $0x7f8] sm:$0xff]
    %v651 = vld [vmem:[#allocation8 + $0x800] sm:$0xff]
    %v652 = vld [vmem:[#allocation8 + $0x808] sm:$0xff]
    %v653 = vld [vmem:[#allocation8 + $0x810] sm:$0xff]
    %v654 = vld [vmem:[#allocation8 + $0x818] sm:$0xff]
    %v655 = vld [vmem:[#allocation8 + $0x820] sm:$0xff]
    %v656 = vld [vmem:[#allocation8 + $0x828] sm:$0xff]
    %v657 = vld [vmem:[#allocation8 + $0x830] sm:$0xff]
    %v658 = vld [vmem:[#allocation8 + $0x838] sm:$0xff]
    %v659 = vld [vmem:[#allocation8 + $0x840] sm:$0xff]
    %v660 = vld [vmem:[#allocation8 + $0x848] sm:$0xff]
    %v661 = vld [vmem:[#allocation8 + $0x850] sm:$0xff]
    %v662 = vld [vmem:[#allocation8 + $0x858] sm:$0xff]
    %v663 = vld [vmem:[#allocation8 + $0x860] sm:$0xff]
    %v664 = vld [vmem:[#allocation8 + $0x868] sm:$0xff]
    %v665 = vld [vmem:[#allocation8 + $0x870] sm:$0xff]
    %v666 = vld [vmem:[#allocation8 + $0x878] sm:$0xff]
    %v667 = vld [vmem:[#allocation8 + $0x880] sm:$0xff]
    %v668 = vld [vmem:[#allocation8 + $0x888] sm:$0xff]
    %v669 = vld [vmem:[#allocation8 + $0x890] sm:$0xff]
    %v670 = vld [vmem:[#allocation8 + $0x898] sm:$0xff]
    %v671 = vld [vmem:[#allocation8 + $0x8a0] sm:$0xff]
    %v672 = vld [vmem:[#allocation8 + $0x8a8] sm:$0xff]
    %v673 = vld [vmem:[#allocation8 + $0x8b0] sm:$0xff]
    %v674 = vld [vmem:[#allocation8 + $0x8b8] sm:$0xff]
    %v675 = vld [vmem:[#allocation8 + $0x8c0] sm:$0xff]
    %v676 = vld [vmem:[#allocation8 + $0x8c8] sm:$0xff]
    %v677 = vld [vmem:[#allocation8 + $0x8d0] sm:$0xff]
    %v678 = vld [vmem:[#allocation8 + $0x8d8] sm:$0xff]
    %v679 = vld [vmem:[#allocation8 + $0x8e0] sm:$0xff]
    %v680 = vld [vmem:[#allocation8 + $0x8e8] sm:$0xff]
    %v681 = vld [vmem:[#allocation8 + $0x8f0] sm:$0xff]
    %v682 = vld [vmem:[#allocation8 + $0x8f8] sm:$0xff]
    %v683 = vld [vmem:[#allocation8 + $0x900] sm:$0xff]
    %v684 = vld [vmem:[#allocation8 + $0x908] sm:$0xff]
    %v685 = vld [vmem:[#allocation8 + $0x910] sm:$0xff]
    %v686 = vld [vmem:[#allocation8 + $0x918] sm:$0xff]
    %v687 = vld [vmem:[#allocation8 + $0x920] sm:$0xff]
    %v688 = vld [vmem:[#allocation8 + $0x928] sm:$0xff]
    %v689 = vld [vmem:[#allocation8 + $0x930] sm:$0xff]
    %v690 = vld [vmem:[#allocation8 + $0x938] sm:$0xff]
    %v691 = vld [vmem:[#allocation8 + $0x940] sm:$0xff]
    %v692 = vld [vmem:[#allocation8 + $0x948] sm:$0xff]
    %v693 = vld [vmem:[#allocation8 + $0x950] sm:$0xff]
    %v694 = vld [vmem:[#allocation8 + $0x958] sm:$0xff]
    %v695 = vld [vmem:[#allocation8 + $0x960] sm:$0xff]
    %v696 = vld [vmem:[#allocation8 + $0x968] sm:$0xff]
    %v697 = vld [vmem:[#allocation8 + $0x970] sm:$0xff]
    %v698 = vld [vmem:[#allocation8 + $0x978] sm:$0xff]
    %v699 = vld [vmem:[#allocation8 + $0x980] sm:$0xff]
    %v700 = vld [vmem:[#allocation8 + $0x988] sm:$0xff]
    %v701 = vld [vmem:[#allocation8 + $0x990] sm:$0xff]
    %v702 = vld [vmem:[#allocation8 + $0x998] sm:$0xff]
    %v703 = vld [vmem:[#allocation8 + $0x9a0] sm:$0xff]
    %v704 = vld [vmem:[#allocation8 + $0x9a8] sm:$0xff]
    %v705 = vld [vmem:[#allocation8 + $0x9b0] sm:$0xff]
    %v706 = vld [vmem:[#allocation8 + $0x9b8] sm:$0xff]
    %v707 = vld [vmem:[#allocation8 + $0x9c0] sm:$0xff]
    %v708 = vld [vmem:[#allocation8 + $0x9c8] sm:$0xff]
    %v709 = vld [vmem:[#allocation8 + $0x9d0] sm:$0xff]
    %v710 = vld [vmem:[#allocation8 + $0x9d8] sm:$0xff]
    %v711 = vld [vmem:[#allocation8 + $0x9e0] sm:$0xff]
    %v712 = vld [vmem:[#allocation8 + $0x9e8] sm:$0xff]
    %v713 = vld [vmem:[#allocation8 + $0x9f0] sm:$0xff]
    %v714 = vld [vmem:[#allocation8 + $0x9f8] sm:$0xff]
    %v715 = vld [vmem:[#allocation8 + $0xa00] sm:$0xff]
    %v716 = vld [vmem:[#allocation8 + $0xa08] sm:$0xff]
    %v717 = vld [vmem:[#allocation8 + $0xa10] sm:$0xff]
    %v718 = vld [vmem:[#allocation8 + $0xa18] sm:$0xff]
    %v719 = vld [vmem:[#allocation8 + $0xa20] sm:$0xff]
    %v720 = vld [vmem:[#allocation8 + $0xa28] sm:$0xff]
    %v721 = vld [vmem:[#allocation8 + $0xa30] sm:$0xff]
    %v722 = vld [vmem:[#allocation8 + $0xa38] sm:$0xff]
    %v723 = vld [vmem:[#allocation8 + $0xa40] sm:$0xff]
    %v724 = vld [vmem:[#allocation8 + $0xa48] sm:$0xff]
    %v725 = vld [vmem:[#allocation8 + $0xa50] sm:$0xff]
    %v726 = vld [vmem:[#allocation8 + $0xa58] sm:$0xff]
    %v727 = vld [vmem:[#allocation8 + $0xa60] sm:$0xff]
    %v728 = vld [vmem:[#allocation8 + $0xa68] sm:$0xff]
    %v729 = vld [vmem:[#allocation8 + $0xa70] sm:$0xff]
    %v730 = vld [vmem:[#allocation8 + $0xa78] sm:$0xff]
    %v731 = vld [vmem:[#allocation8 + $0xa80] sm:$0xff]
    %v732 = vld [vmem:[#allocation8 + $0xa88] sm:$0xff]
    %v733 = vld [vmem:[#allocation8 + $0xa90] sm:$0xff]
    %v734 = vld [vmem:[#allocation8 + $0xa98] sm:$0xff]
    %v735 = vld [vmem:[#allocation8 + $0xaa0] sm:$0xff]
    %v736 = vld [vmem:[#allocation8 + $0xaa8] sm:$0xff]
    %v737 = vld [vmem:[#allocation8 + $0xab0] sm:$0xff]
    %v738 = vld [vmem:[#allocation8 + $0xab8] sm:$0xff]
    %v739 = vld [vmem:[#allocation8 + $0xac0] sm:$0xff]
    %v740 = vld [vmem:[#allocation8 + $0xac8] sm:$0xff]
    %v741 = vld [vmem:[#allocation8 + $0xad0] sm:$0xff]
    %v742 = vld [vmem:[#allocation8 + $0xad8] sm:$0xff]
    %v743 = vld [vmem:[#allocation8 + $0xae0] sm:$0xff]
    %v744 = vld [vmem:[#allocation8 + $0xae8] sm:$0xff]
    %v745 = vld [vmem:[#allocation8 + $0xaf0] sm:$0xff]
    %v746 = vld [vmem:[#allocation8 + $0xaf8] sm:$0xff]
    %v747 = vld [vmem:[#allocation8 + $0xb00] sm:$0xff]
    %v748 = vld [vmem:[#allocation8 + $0xb08] sm:$0xff]
    %v749 = vld [vmem:[#allocation8 + $0xb10] sm:$0xff]
    %v750 = vld [vmem:[#allocation8 + $0xb18] sm:$0xff]
    %v751 = vld [vmem:[#allocation8 + $0xb20] sm:$0xff]
    %v752 = vld [vmem:[#allocation8 + $0xb28] sm:$0xff]
    %v753 = vld [vmem:[#allocation8 + $0xb30] sm:$0xff]
    %v754 = vld [vmem:[#allocation8 + $0xb38] sm:$0xff]
    %v755 = vld [vmem:[#allocation8 + $0xb40] sm:$0xff]
    %v756 = vld [vmem:[#allocation8 + $0xb48] sm:$0xff]
    %v757 = vld [vmem:[#allocation8 + $0xb50] sm:$0xff]
    %v758 = vld [vmem:[#allocation8 + $0xb58] sm:$0xff]
    %v759 = vld [vmem:[#allocation8 + $0xb60] sm:$0xff]
    %v760 = vld [vmem:[#allocation8 + $0xb68] sm:$0xff]
    %v761 = vld [vmem:[#allocation8 + $0xb70] sm:$0xff]
    %v762 = vld [vmem:[#allocation8 + $0xb78] sm:$0xff]
    %v763 = vld [vmem:[#allocation8 + $0xb80] sm:$0xff]
    %v764 = vld [vmem:[#allocation8 + $0xb88] sm:$0xff]
    %v765 = vld [vmem:[#allocation8 + $0xb90] sm:$0xff]
    %v766 = vld [vmem:[#allocation8 + $0xb98] sm:$0xff]
    %v767 = vld [vmem:[#allocation8 + $0xba0] sm:$0xff]
    %v768 = vld [vmem:[#allocation8 + $0xba8] sm:$0xff]
    %v769 = vld [vmem:[#allocation8 + $0xbb0] sm:$0xff]
    %v770 = vld [vmem:[#allocation8 + $0xbb8] sm:$0xff]
    %v771 = vld [vmem:[#allocation8 + $0xbc0] sm:$0xff]
    %v772 = vld [vmem:[#allocation8 + $0xbc8] sm:$0xff]
    %v773 = vld [vmem:[#allocation8 + $0xbd0] sm:$0xff]
    %v774 = vld [vmem:[#allocation8 + $0xbd8] sm:$0xff]
    %v775 = vld [vmem:[#allocation8 + $0xbe0] sm:$0xff]
    %v776 = vld [vmem:[#allocation8 + $0xbe8] sm:$0xff]
    %v777 = vld [vmem:[#allocation8 + $0xbf0] sm:$0xff]
    %v778 = vld [vmem:[#allocation8 + $0xbf8] sm:$0xff]
    %779 = vmatprep.subr.mxu0 %v396
    %780 = vmatpush1.msra.mxu0 %v395
    %781 = vmatprep.subr.mxu0 %v402
    %782 = vmatpush1.msra.mxu0 %v401
    %783 = vmatprep.subr.mxu0 %v408
    %784 = vmatpush1.msra.mxu0 %v407
    %785 = vmatprep.subr.mxu0 %v414
    %786 = vmatpush1.msra.mxu0 %v413
    %787 = vmatprep.subr.mxu0 %v420
    %788 = vmatpush1.msra.mxu0 %v419
    %789 = vmatprep.subr.mxu0 %v426
    %790 = vmatpush1.msra.mxu0 %v425
    %791 = vmatprep.subr.mxu0 %v432
    %792 = vmatpush1.msra.mxu0 %v431
    %793 = vmatprep.subr.mxu0 %v438
    %794 = vmatpush1.msra.mxu0 %v437
    %795 = vmatprep.subr.mxu0 %v444
    %796 = vmatpush1.msra.mxu0 %v443
    %797 = vmatprep.subr.mxu0 %v450
    %798 = vmatpush1.msra.mxu0 %v449
    %799 = vmatprep.subr.mxu0 %v456
    %800 = vmatpush1.msra.mxu0 %v455
    %801 = vmatprep.subr.mxu0 %v462
    %802 = vmatpush1.msra.mxu0 %v461
    %803 = vmatprep.subr.mxu0 %v468
    %804 = vmatpush1.msra.mxu0 %v467
    %805 = vmatprep.subr.mxu0 %v474
    %806 = vmatpush1.msra.mxu0 %v473
    %807 = vmatprep.subr.mxu0 %v480
    %808 = vmatpush1.msra.mxu0 %v479
    %809 = vmatprep.subr.mxu0 %v486
    %810 = vmatpush1.msra.mxu0 %v485
    %811 = vmatprep.subr.mxu0 %v492
    %812 = vmatpush1.msra.mxu0 %v491
    %813 = vmatprep.subr.mxu0 %v498
    %814 = vmatpush1.msra.mxu0 %v497
    %815 = vmatprep.subr.mxu0 %v504
    %816 = vmatpush1.msra.mxu0 %v503
    %817 = vmatprep.subr.mxu0 %v510
    %818 = vmatpush1.msra.mxu0 %v509
    %819 = vmatprep.subr.mxu0 %v516
    %820 = vmatpush1.msra.mxu0 %v515
    %821 = vmatprep.subr.mxu0 %v522
    %822 = vmatpush1.msra.mxu0 %v521
    %823 = vmatprep.subr.mxu0 %v528
    %824 = vmatpush1.msra.mxu0 %v527
    %825 = vmatprep.subr.mxu0 %v534
    %826 = vmatpush1.msra.mxu0 %v533
    %827 = vmatprep.subr.mxu0 %v540
    %828 = vmatpush1.msra.mxu0 %v539
    %829 = vmatprep.subr.mxu0 %v546
    %830 = vmatpush1.msra.mxu0 %v545
    %831 = vmatprep.subr.mxu0 %v552
    %832 = vmatpush1.msra.mxu0 %v551
    %833 = vmatprep.subr.mxu0 %v558
    %834 = vmatpush1.msra.mxu0 %v557
    %835 = vmatprep.subr.mxu0 %v564
    %836 = vmatpush1.msra.mxu0 %v563
    %837 = vmatprep.subr.mxu0 %v570
    %838 = vmatpush1.msra.mxu0 %v569
    %839 = vmatprep.subr.mxu0 %v576
    %840 = vmatpush1.msra.mxu0 %v575
    %841 = vmatprep.subr.mxu0 %v582
    %842 = vmatpush1.msra.mxu0 %v581
    %843 = vmatprep.mubr.f32.mxu0 %v389
    %844 = vmatmul.mubr.f32.gmra.mrb[0].mxu0 %v387
    %v845 = vpop.f32.mrb[0].mxu0
    %v846 = vadd.f32 0.0, %v845
    %v847 = vpop.f32.mrb[0].mxu0
    %v848 = vadd.f32 0.0, %v847
    %849 = vdwg.mxu0
    %850 = vmatprep.subr.mxu0 %v588
    %851 = vmatpush1.msra.mxu0 %v587
    %852 = vmatprep.subr.mxu0 %v594
    %853 = vmatpush1.msra.mxu0 %v593
    %854 = vmatprep.subr.mxu0 %v600
    %855 = vmatpush1.msra.mxu0 %v599
    %856 = vmatprep.subr.mxu0 %v606
    %857 = vmatpush1.msra.mxu0 %v605
    %858 = vmatprep.subr.mxu0 %v612
    %859 = vmatpush1.msra.mxu0 %v611
    %860 = vmatprep.subr.mxu0 %v618
    %861 = vmatpush1.msra.mxu0 %v617
    %862 = vmatprep.subr.mxu0 %v624
    %863 = vmatpush1.msra.mxu0 %v623
    %864 = vmatprep.subr.mxu0 %v630
    %865 = vmatpush1.msra.mxu0 %v629
    %866 = vmatprep.subr.mxu0 %v636
    %867 = vmatpush1.msra.mxu0 %v635
    %868 = vmatprep.subr.mxu0 %v642
    %869 = vmatpush1.msra.mxu0 %v641
    %870 = vmatprep.subr.mxu0 %v648
    %871 = vmatpush1.msra.mxu0 %v647
    %872 = vmatprep.subr.mxu0 %v654
    %873 = vmatpush1.msra.mxu0 %v653
    %874 = vmatprep.subr.mxu0 %v660
    %875 = vmatpush1.msra.mxu0 %v659
    %876 = vmatprep.subr.mxu0 %v666
    %877 = vmatpush1.msra.mxu0 %v665
    %878 = vmatprep.subr.mxu0 %v672
    %879 = vmatpush1.msra.mxu0 %v671
    %880 = vmatprep.subr.mxu0 %v678
    %881 = vmatpush1.msra.mxu0 %v677
    %882 = vmatprep.subr.mxu0 %v684
    %883 = vmatpush1.msra.mxu0 %v683
    %884 = vmatprep.subr.mxu0 %v690
    %885 = vmatpush1.msra.mxu0 %v689
    %886 = vmatprep.subr.mxu0 %v696
    %887 = vmatpush1.msra.mxu0 %v695
    %888 = vmatprep.subr.mxu0 %v702
    %889 = vmatpush1.msra.mxu0 %v701
    %890 = vmatprep.subr.mxu0 %v708
    %891 = vmatpush1.msra.mxu0 %v707
    %892 = vmatprep.subr.mxu0 %v714
    %893 = vmatpush1.msra.mxu0 %v713
    %894 = vmatprep.subr.mxu0 %v720
    %895 = vmatpush1.msra.mxu0 %v719
    %896 = vmatprep.subr.mxu0 %v726
    %897 = vmatpush1.msra.mxu0 %v725
    %898 = vmatprep.subr.mxu0 %v732
    %899 = vmatpush1.msra.mxu0 %v731
    %900 = vmatprep.subr.mxu0 %v738
    %901 = vmatpush1.msra.mxu0 %v737
    %902 = vmatprep.subr.mxu0 %v744
    %903 = vmatpush1.msra.mxu0 %v743
    %904 = vmatprep.subr.mxu0 %v750
    %905 = vmatpush1.msra.mxu0 %v749
    %906 = vmatprep.subr.mxu0 %v756
    %907 = vmatpush1.msra.mxu0 %v755
    %908 = vmatprep.subr.mxu0 %v762
    %909 = vmatpush1.msra.mxu0 %v761
    %910 = vmatprep.subr.mxu0 %v768
    %911 = vmatpush1.msra.mxu0 %v767
    %912 = vmatprep.subr.mxu0 %v774
    %913 = vmatpush1.msra.mxu0 %v773
    %914 = vmatprep.mubr.f32.mxu0 %v393
    %915 = vmatmul.mubr.f32.gmra.mrb[0].mxu0 %v391
    %v916 = vpop.f32.mrb[0].mxu0
    %v917 = vadd.f32 %v846, %v916
    %v918 = vpop.f32.mrb[0].mxu0
    %v919 = vadd.f32 %v848, %v918
    %920 = vdwg.mxu0
    %921 = vmatprep.subr.mxu0 %v398
    %922 = vmatpush1.msra.mxu0 %v397
    %923 = vmatprep.subr.mxu0 %v404
    %924 = vmatpush1.msra.mxu0 %v403
    %925 = vmatprep.subr.mxu0 %v410
    %926 = vmatpush1.msra.mxu0 %v409
    %927 = vmatprep.subr.mxu0 %v416
    %928 = vmatpush1.msra.mxu0 %v415
    %929 = vmatprep.subr.mxu0 %v422
    %930 = vmatpush1.msra.mxu0 %v421
    %931 = vmatprep.subr.mxu0 %v428
    %932 = vmatpush1.msra.mxu0 %v427
    %933 = vmatprep.subr.mxu0 %v434
    %934 = vmatpush1.msra.mxu0 %v433
    %935 = vmatprep.subr.mxu0 %v440
    %936 = vmatpush1.msra.mxu0 %v439
    %937 = vmatprep.subr.mxu0 %v446
    %938 = vmatpush1.msra.mxu0 %v445
    %939 = vmatprep.subr.mxu0 %v452
    %940 = vmatpush1.msra.mxu0 %v451
    %941 = vmatprep.subr.mxu0 %v458
    %942 = vmatpush1.msra.mxu0 %v457
    %943 = vmatprep.subr.mxu0 %v464
    %944 = vmatpush1.msra.mxu0 %v463
    %945 = vmatprep.subr.mxu0 %v470
    %946 = vmatpush1.msra.mxu0 %v469
    %947 = vmatprep.subr.mxu0 %v476
    %948 = vmatpush1.msra.mxu0 %v475
    %949 = vmatprep.subr.mxu0 %v482
    %950 = vmatpush1.msra.mxu0 %v481
    %951 = vmatprep.subr.mxu0 %v488
    %952 = vmatpush1.msra.mxu0 %v487
    %953 = vmatprep.subr.mxu0 %v494
    %954 = vmatpush1.msra.mxu0 %v493
    %955 = vmatprep.subr.mxu0 %v500
    %956 = vmatpush1.msra.mxu0 %v499
    %957 = vmatprep.subr.mxu0 %v506
    %958 = vmatpush1.msra.mxu0 %v505
    %959 = vmatprep.subr.mxu0 %v512
    %960 = vmatpush1.msra.mxu0 %v511
    %961 = vmatprep.subr.mxu0 %v518
    %962 = vmatpush1.msra.mxu0 %v517
    %963 = vmatprep.subr.mxu0 %v524
    %964 = vmatpush1.msra.mxu0 %v523
    %965 = vmatprep.subr.mxu0 %v530
    %966 = vmatpush1.msra.mxu0 %v529
    %967 = vmatprep.subr.mxu0 %v536
    %968 = vmatpush1.msra.mxu0 %v535
    %969 = vmatprep.subr.mxu0 %v542
    %970 = vmatpush1.msra.mxu0 %v541
    %971 = vmatprep.subr.mxu0 %v548
    %972 = vmatpush1.msra.mxu0 %v547
    %973 = vmatprep.subr.mxu0 %v554
    %974 = vmatpush1.msra.mxu0 %v553
    %975 = vmatprep.subr.mxu0 %v560
    %976 = vmatpush1.msra.mxu0 %v559
    %977 = vmatprep.subr.mxu0 %v566
    %978 = vmatpush1.msra.mxu0 %v565
    %979 = vmatprep.subr.mxu0 %v572
    %980 = vmatpush1.msra.mxu0 %v571
    %981 = vmatprep.subr.mxu0 %v578
    %982 = vmatpush1.msra.mxu0 %v577
    %983 = vmatprep.subr.mxu0 %v584
    %984 = vmatpush1.msra.mxu0 %v583
    %985 = vmatprep.mubr.f32.mxu0 %v389
    %986 = vmatmul.mubr.f32.gmra.mrb[0].mxu0 %v387
    %v987 = vpop.f32.mrb[0].mxu0
    %v988 = vadd.f32 0.0, %v987
    %v989 = vpop.f32.mrb[0].mxu0
    %v990 = vadd.f32 0.0, %v989
    %991 = vdwg.mxu0
    %992 = vmatprep.subr.mxu0 %v590
    %993 = vmatpush1.msra.mxu0 %v589
    %994 = vmatprep.subr.mxu0 %v596
    %995 = vmatpush1.msra.mxu0 %v595
    %996 = vmatprep.subr.mxu0 %v602
    %997 = vmatpush1.msra.mxu0 %v601
    %998 = vmatprep.subr.mxu0 %v608
    %999 = vmatpush1.msra.mxu0 %v607
    %1000 = vmatprep.subr.mxu0 %v614
    %1001 = vmatpush1.msra.mxu0 %v613
    %1002 = vmatprep.subr.mxu0 %v620
    %1003 = vmatpush1.msra.mxu0 %v619
    %1004 = vmatprep.subr.mxu0 %v626
    %1005 = vmatpush1.msra.mxu0 %v625
    %1006 = vmatprep.subr.mxu0 %v632
    %1007 = vmatpush1.msra.mxu0 %v631
    %1008 = vmatprep.subr.mxu0 %v638
    %1009 = vmatpush1.msra.mxu0 %v637
    %1010 = vmatprep.subr.mxu0 %v644
    %1011 = vmatpush1.msra.mxu0 %v643
    %1012 = vmatprep.subr.mxu0 %v650
    %1013 = vmatpush1.msra.mxu0 %v649
    %1014 = vmatprep.subr.mxu0 %v656
    %1015 = vmatpush1.msra.mxu0 %v655
    %1016 = vmatprep.subr.mxu0 %v662
    %1017 = vmatpush1.msra.mxu0 %v661
    %1018 = vmatprep.subr.mxu0 %v668
    %1019 = vmatpush1.msra.mxu0 %v667
    %1020 = vmatprep.subr.mxu0 %v674
    %1021 = vmatpush1.msra.mxu0 %v673
    %1022 = vmatprep.subr.mxu0 %v680
    %1023 = vmatpush1.msra.mxu0 %v679
    %1024 = vmatprep.subr.mxu0 %v686
    %1025 = vmatpush1.msra.mxu0 %v685
    %1026 = vmatprep.subr.mxu0 %v692
    %1027 = vmatpush1.msra.mxu0 %v691
    %1028 = vmatprep.subr.mxu0 %v698
    %1029 = vmatpush1.msra.mxu0 %v697
    %1030 = vmatprep.subr.mxu0 %v704
    %1031 = vmatpush1.msra.mxu0 %v703
    %1032 = vmatprep.subr.mxu0 %v710
    %1033 = vmatpush1.msra.mxu0 %v709
    %1034 = vmatprep.subr.mxu0 %v716
    %1035 = vmatpush1.msra.mxu0 %v715
    %1036 = vmatprep.subr.mxu0 %v722
    %1037 = vmatpush1.msra.mxu0 %v721
    %1038 = vmatprep.subr.mxu0 %v728
    %1039 = vmatpush1.msra.mxu0 %v727
    %1040 = vmatprep.subr.mxu0 %v734
    %1041 = vmatpush1.msra.mxu0 %v733
    %1042 = vmatprep.subr.mxu0 %v740
    %1043 = vmatpush1.msra.mxu0 %v739
    %1044 = vmatprep.subr.mxu0 %v746
    %1045 = vmatpush1.msra.mxu0 %v745
    %1046 = vmatprep.subr.mxu0 %v752
    %1047 = vmatpush1.msra.mxu0 %v751
    %1048 = vmatprep.subr.mxu0 %v758
    %1049 = vmatpush1.msra.mxu0 %v757
    %1050 = vmatprep.subr.mxu0 %v764
    %1051 = vmatpush1.msra.mxu0 %v763
    %1052 = vmatprep.subr.mxu0 %v770
    %1053 = vmatpush1.msra.mxu0 %v769
    %1054 = vmatprep.subr.mxu0 %v776
    %1055 = vmatpush1.msra.mxu0 %v775
    %1056 = vmatprep.mubr.f32.mxu0 %v393
    %1057 = vmatmul.mubr.f32.gmra.mrb[0].mxu0 %v391
    %v1058 = vpop.f32.mrb[0].mxu0
    %v1059 = vadd.f32 %v988, %v1058
    %v1060 = vpop.f32.mrb[0].mxu0
    %v1061 = vadd.f32 %v990, %v1060
    %1062 = vdwg.mxu0
    %1063 = vmatprep.subr.mxu0 %v400
    %1064 = vmatpush1.msra.mxu0 %v399
    %1065 = vmatprep.subr.mxu0 %v406
    %1066 = vmatpush1.msra.mxu0 %v405
    %1067 = vmatprep.subr.mxu0 %v412
    %1068 = vmatpush1.msra.mxu0 %v411
    %1069 = vmatprep.subr.mxu0 %v418
    %1070 = vmatpush1.msra.mxu0 %v417
    %1071 = vmatprep.subr.mxu0 %v424
    %1072 = vmatpush1.msra.mxu0 %v423
    %1073 = vmatprep.subr.mxu0 %v430
    %1074 = vmatpush1.msra.mxu0 %v429
    %1075 = vmatprep.subr.mxu0 %v436
    %1076 = vmatpush1.msra.mxu0 %v435
    %1077 = vmatprep.subr.mxu0 %v442
    %1078 = vmatpush1.msra.mxu0 %v441
    %1079 = vmatprep.subr.mxu0 %v448
    %1080 = vmatpush1.msra.mxu0 %v447
    %1081 = vmatprep.subr.mxu0 %v454
    %1082 = vmatpush1.msra.mxu0 %v453
    %1083 = vmatprep.subr.mxu0 %v460
    %1084 = vmatpush1.msra.mxu0 %v459
    %1085 = vmatprep.subr.mxu0 %v466
    %1086 = vmatpush1.msra.mxu0 %v465
    %1087 = vmatprep.subr.mxu0 %v472
    %1088 = vmatpush1.msra.mxu0 %v471
    %1089 = vmatprep.subr.mxu0 %v478
    %1090 = vmatpush1.msra.mxu0 %v477
    %1091 = vmatprep.subr.mxu0 %v484
    %1092 = vmatpush1.msra.mxu0 %v483
    %1093 = vmatprep.subr.mxu0 %v490
    %1094 = vmatpush1.msra.mxu0 %v489
    %1095 = vmatprep.subr.mxu0 %v496
    %1096 = vmatpush1.msra.mxu0 %v495
    %1097 = vmatprep.subr.mxu0 %v502
    %1098 = vmatpush1.msra.mxu0 %v501
    %1099 = vmatprep.subr.mxu0 %v508
    %1100 = vmatpush1.msra.mxu0 %v507
    %1101 = vmatprep.subr.mxu0 %v514
    %1102 = vmatpush1.msra.mxu0 %v513
    %1103 = vmatprep.subr.mxu0 %v520
    %1104 = vmatpush1.msra.mxu0 %v519
    %1105 = vmatprep.subr.mxu0 %v526
    %1106 = vmatpush1.msra.mxu0 %v525
    %1107 = vmatprep.subr.mxu0 %v532
    %1108 = vmatpush1.msra.mxu0 %v531
    %1109 = vmatprep.subr.mxu0 %v538
    %1110 = vmatpush1.msra.mxu0 %v537
    %1111 = vmatprep.subr.mxu0 %v544
    %1112 = vmatpush1.msra.mxu0 %v543
    %1113 = vmatprep.subr.mxu0 %v550
    %1114 = vmatpush1.msra.mxu0 %v549
    %1115 = vmatprep.subr.mxu0 %v556
    %1116 = vmatpush1.msra.mxu0 %v555
    %1117 = vmatprep.subr.mxu0 %v562
    %1118 = vmatpush1.msra.mxu0 %v561
    %1119 = vmatprep.subr.mxu0 %v568
    %1120 = vmatpush1.msra.mxu0 %v567
    %1121 = vmatprep.subr.mxu0 %v574
    %1122 = vmatpush1.msra.mxu0 %v573
    %1123 = vmatprep.subr.mxu0 %v580
    %1124 = vmatpush1.msra.mxu0 %v579
    %1125 = vmatprep.subr.mxu0 %v586
    %1126 = vmatpush1.msra.mxu0 %v585
    %1127 = vmatprep.mubr.f32.mxu0 %v389
    %1128 = vmatmul.mubr.f32.gmra.mrb[0].mxu0 %v387
    %v1129 = vpop.f32.mrb[0].mxu0
    %v1130 = vadd.f32 0.0, %v1129
    %v1131 = vpop.f32.mrb[0].mxu0
    %v1132 = vadd.f32 0.0, %v1131
    %1133 = vdwg.mxu0
    %1134 = vmatprep.subr.mxu0 %v592
    %1135 = vmatpush1.msra.mxu0 %v591
    %1136 = vmatprep.subr.mxu0 %v598
    %1137 = vmatpush1.msra.mxu0 %v597
    %1138 = vmatprep.subr.mxu0 %v604
    %1139 = vmatpush1.msra.mxu0 %v603
    %1140 = vmatprep.subr.mxu0 %v610
    %1141 = vmatpush1.msra.mxu0 %v609
    %1142 = vmatprep.subr.mxu0 %v616
    %1143 = vmatpush1.msra.mxu0 %v615
    %1144 = vmatprep.subr.mxu0 %v622
    %1145 = vmatpush1.msra.mxu0 %v621
    %1146 = vmatprep.subr.mxu0 %v628
    %1147 = vmatpush1.msra.mxu0 %v627
    %1148 = vmatprep.subr.mxu0 %v634
    %1149 = vmatpush1.msra.mxu0 %v633
    %1150 = vmatprep.subr.mxu0 %v640
    %1151 = vmatpush1.msra.mxu0 %v639
    %1152 = vmatprep.subr.mxu0 %v646
    %1153 = vmatpush1.msra.mxu0 %v645
    %1154 = vmatprep.subr.mxu0 %v652
    %1155 = vmatpush1.msra.mxu0 %v651
    %1156 = vmatprep.subr.mxu0 %v658
    %1157 = vmatpush1.msra.mxu0 %v657
    %1158 = vmatprep.subr.mxu0 %v664
    %1159 = vmatpush1.msra.mxu0 %v663
    %1160 = vmatprep.subr.mxu0 %v670
    %1161 = vmatpush1.msra.mxu0 %v669
    %1162 = vmatprep.subr.mxu0 %v676
    %1163 = vmatpush1.msra.mxu0 %v675
    %1164 = vmatprep.subr.mxu0 %v682
    %1165 = vmatpush1.msra.mxu0 %v681
    %1166 = vmatprep.subr.mxu0 %v688
    %1167 = vmatpush1.msra.mxu0 %v687
    %1168 = vmatprep.subr.mxu0 %v694
    %1169 = vmatpush1.msra.mxu0 %v693
    %1170 = vmatprep.subr.mxu0 %v700
    %1171 = vmatpush1.msra.mxu0 %v699
    %1172 = vmatprep.subr.mxu0 %v706
    %1173 = vmatpush1.msra.mxu0 %v705
    %1174 = vmatprep.subr.mxu0 %v712
    %1175 = vmatpush1.msra.mxu0 %v711
    %1176 = vmatprep.subr.mxu0 %v718
    %1177 = vmatpush1.msra.mxu0 %v717
    %1178 = vmatprep.subr.mxu0 %v724
    %1179 = vmatpush1.msra.mxu0 %v723
    %1180 = vmatprep.subr.mxu0 %v730
    %1181 = vmatpush1.msra.mxu0 %v729
    %1182 = vmatprep.subr.mxu0 %v736
    %1183 = vmatpush1.msra.mxu0 %v735
    %1184 = vmatprep.subr.mxu0 %v742
    %1185 = vmatpush1.msra.mxu0 %v741
    %1186 = vmatprep.subr.mxu0 %v748
    %1187 = vmatpush1.msra.mxu0 %v747
    %1188 = vmatprep.subr.mxu0 %v754
    %1189 = vmatpush1.msra.mxu0 %v753
    %1190 = vmatprep.subr.mxu0 %v760
    %1191 = vmatpush1.msra.mxu0 %v759
    %1192 = vmatprep.subr.mxu0 %v766
    %1193 = vmatpush1.msra.mxu0 %v765
    %1194 = vmatprep.subr.mxu0 %v772
    %1195 = vmatpush1.msra.mxu0 %v771
    %1196 = vmatprep.subr.mxu0 %v778
    %1197 = vmatpush1.msra.mxu0 %v777
    %1198 = vmatprep.mubr.f32.mxu0 %v393
    %1199 = vmatmul.mubr.f32.gmra.mrb[0].mxu0 %v391
    %v1200 = vpop.f32.mrb[0].mxu0
    %v1201 = vadd.f32 %v1130, %v1200
    %v1202 = vpop.f32.mrb[0].mxu0
    %v1203 = vadd.f32 %v1132, %v1202
    %1204 = vdwg.mxu0
    %v1205 = vmax.f32 %v917, 0.0
    %v1206 = vmax.f32 %v919, 0.0
    %v1207 = vmax.f32 %v1059, 0.0
    %v1208 = vmax.f32 %v1061, 0.0
    %v1209 = vmax.f32 %v1201, 0.0
    %v1210 = vmax.f32 %v1203, 0.0
    %v1211 = vld [vmem:[#allocation10] sm:$0xff]
    %v1212 = vld [vmem:[#allocation10 + $0x8] sm:$0xff]
    %v1213 = vld [vmem:[#allocation10 + $0x10] sm:$0xff]
    %v1214 = vld [vmem:[#allocation10 + $0x18] sm:$0xff]
    %v1215 = vld [vmem:[#allocation10 + $0x20] sm:$0xff]
    %v1216 = vld [vmem:[#allocation10 + $0x28] sm:$0xff]
    %v1217 = vld [vmem:[#allocation10 + $0x30] sm:$0xff]
    %v1218 = vld [vmem:[#allocation10 + $0x38] sm:$0xff]
    %v1219 = vld [vmem:[#allocation10 + $0x40] sm:$0xff]
    %v1220 = vld [vmem:[#allocation10 + $0x48] sm:$0xff]
    %v1221 = vld [vmem:[#allocation10 + $0x50] sm:$0xff]
    %v1222 = vld [vmem:[#allocation10 + $0x58] sm:$0xff]
    %v1223 = vld [vmem:[#allocation10 + $0x60] sm:$0xff]
    %v1224 = vld [vmem:[#allocation10 + $0x68] sm:$0xff]
    %v1225 = vld [vmem:[#allocation10 + $0x70] sm:$0xff]
    %v1226 = vld [vmem:[#allocation10 + $0x78] sm:$0xff]
    %v1227 = vld [vmem:[#allocation10 + $0x80] sm:$0xff]
    %v1228 = vld [vmem:[#allocation10 + $0x88] sm:$0xff]
    %v1229 = vld [vmem:[#allocation10 + $0x90] sm:$0xff]
    %v1230 = vld [vmem:[#allocation10 + $0x98] sm:$0xff]
    %v1231 = vld [vmem:[#allocation10 + $0xa0] sm:$0xff]
    %v1232 = vld [vmem:[#allocation10 + $0xa8] sm:$0xff]
    %v1233 = vld [vmem:[#allocation10 + $0xb0] sm:$0xff]
    %v1234 = vld [vmem:[#allocation10 + $0xb8] sm:$0xff]
    %v1235 = vld [vmem:[#allocation10 + $0xc0] sm:$0xff]
    %v1236 = vld [vmem:[#allocation10 + $0xc8] sm:$0xff]
    %v1237 = vld [vmem:[#allocation10 + $0xd0] sm:$0xff]
    %v1238 = vld [vmem:[#allocation10 + $0xd8] sm:$0xff]
    %v1239 = vld [vmem:[#allocation10 + $0xe0] sm:$0xff]
    %v1240 = vld [vmem:[#allocation10 + $0xe8] sm:$0xff]
    %v1241 = vld [vmem:[#allocation10 + $0xf0] sm:$0xff]
    %v1242 = vld [vmem:[#allocation10 + $0xf8] sm:$0xff]
    %v1243 = vld [vmem:[#allocation10 + $0x100] sm:$0xff]
    %v1244 = vld [vmem:[#allocation10 + $0x108] sm:$0xff]
    %v1245 = vld [vmem:[#allocation10 + $0x110] sm:$0xff]
    %v1246 = vld [vmem:[#allocation10 + $0x118] sm:$0xff]
    %v1247 = vld [vmem:[#allocation10 + $0x120] sm:$0xff]
    %v1248 = vld [vmem:[#allocation10 + $0x128] sm:$0xff]
    %v1249 = vld [vmem:[#allocation10 + $0x130] sm:$0xff]
    %v1250 = vld [vmem:[#allocation10 + $0x138] sm:$0xff]
    %v1251 = vld [vmem:[#allocation10 + $0x140] sm:$0xff]
    %v1252 = vld [vmem:[#allocation10 + $0x148] sm:$0xff]
    %v1253 = vld [vmem:[#allocation10 + $0x150] sm:$0xff]
    %v1254 = vld [vmem:[#allocation10 + $0x158] sm:$0xff]
    %v1255 = vld [vmem:[#allocation10 + $0x160] sm:$0xff]
    %v1256 = vld [vmem:[#allocation10 + $0x168] sm:$0xff]
    %v1257 = vld [vmem:[#allocation10 + $0x170] sm:$0xff]
    %v1258 = vld [vmem:[#allocation10 + $0x178] sm:$0xff]
    %v1259 = vld [vmem:[#allocation10 + $0x180] sm:$0xff]
    %v1260 = vld [vmem:[#allocation10 + $0x188] sm:$0xff]
    %v1261 = vld [vmem:[#allocation10 + $0x190] sm:$0xff]
    %v1262 = vld [vmem:[#allocation10 + $0x198] sm:$0xff]
    %v1263 = vld [vmem:[#allocation10 + $0x1a0] sm:$0xff]
    %v1264 = vld [vmem:[#allocation10 + $0x1a8] sm:$0xff]
    %v1265 = vld [vmem:[#allocation10 + $0x1b0] sm:$0xff]
    %v1266 = vld [vmem:[#allocation10 + $0x1b8] sm:$0xff]
    %v1267 = vld [vmem:[#allocation10 + $0x1c0] sm:$0xff]
    %v1268 = vld [vmem:[#allocation10 + $0x1c8] sm:$0xff]
    %v1269 = vld [vmem:[#allocation10 + $0x1d0] sm:$0xff]
    %v1270 = vld [vmem:[#allocation10 + $0x1d8] sm:$0xff]
    %v1271 = vld [vmem:[#allocation10 + $0x1e0] sm:$0xff]
    %v1272 = vld [vmem:[#allocation10 + $0x1e8] sm:$0xff]
    %v1273 = vld [vmem:[#allocation10 + $0x1f0] sm:$0xff]
    %v1274 = vld [vmem:[#allocation10 + $0x1f8] sm:$0xff]
    %v1275 = vld [vmem:[#allocation10 + $0x200] sm:$0xff]
    %v1276 = vld [vmem:[#allocation10 + $0x208] sm:$0xff]
    %v1277 = vld [vmem:[#allocation10 + $0x210] sm:$0xff]
    %v1278 = vld [vmem:[#allocation10 + $0x218] sm:$0xff]
    %v1279 = vld [vmem:[#allocation10 + $0x220] sm:$0xff]
    %v1280 = vld [vmem:[#allocation10 + $0x228] sm:$0xff]
    %v1281 = vld [vmem:[#allocation10 + $0x230] sm:$0xff]
    %v1282 = vld [vmem:[#allocation10 + $0x238] sm:$0xff]
    %v1283 = vld [vmem:[#allocation10 + $0x240] sm:$0xff]
    %v1284 = vld [vmem:[#allocation10 + $0x248] sm:$0xff]
    %v1285 = vld [vmem:[#allocation10 + $0x250] sm:$0xff]
    %v1286 = vld [vmem:[#allocation10 + $0x258] sm:$0xff]
    %v1287 = vld [vmem:[#allocation10 + $0x260] sm:$0xff]
    %v1288 = vld [vmem:[#allocation10 + $0x268] sm:$0xff]
    %v1289 = vld [vmem:[#allocation10 + $0x270] sm:$0xff]
    %v1290 = vld [vmem:[#allocation10 + $0x278] sm:$0xff]
    %v1291 = vld [vmem:[#allocation10 + $0x280] sm:$0xff]
    %v1292 = vld [vmem:[#allocation10 + $0x288] sm:$0xff]
    %v1293 = vld [vmem:[#allocation10 + $0x290] sm:$0xff]
    %v1294 = vld [vmem:[#allocation10 + $0x298] sm:$0xff]
    %v1295 = vld [vmem:[#allocation10 + $0x2a0] sm:$0xff]
    %v1296 = vld [vmem:[#allocation10 + $0x2a8] sm:$0xff]
    %v1297 = vld [vmem:[#allocation10 + $0x2b0] sm:$0xff]
    %v1298 = vld [vmem:[#allocation10 + $0x2b8] sm:$0xff]
    %v1299 = vld [vmem:[#allocation10 + $0x2c0] sm:$0xff]
    %v1300 = vld [vmem:[#allocation10 + $0x2c8] sm:$0xff]
    %v1301 = vld [vmem:[#allocation10 + $0x2d0] sm:$0xff]
    %v1302 = vld [vmem:[#allocation10 + $0x2d8] sm:$0xff]
    %v1303 = vld [vmem:[#allocation10 + $0x2e0] sm:$0xff]
    %v1304 = vld [vmem:[#allocation10 + $0x2e8] sm:$0xff]
    %v1305 = vld [vmem:[#allocation10 + $0x2f0] sm:$0xff]
    %v1306 = vld [vmem:[#allocation10 + $0x2f8] sm:$0xff]
    %v1307 = vld [vmem:[#allocation11] sm:$0x1]
    %v1309 = vlaneseq
    %v1310 = vshrl.u32 %v1309, 7
    %v1311 = vsub.s32 0, %v1310
    %v1312 = vrot.slane %v1307, %v1311
    %1314 = vmatprep.subr.mxu0 0.0
    %1315 = vmatpush1.msra.mxu0 %v1211
    %1316 = vmatprep.subr.mxu0 0.0
    %1317 = vmatpush1.msra.mxu0 %v1212
    %1318 = vmatprep.subr.mxu0 0.0
    %1319 = vmatpush1.msra.mxu0 %v1213
    %1320 = vmatprep.subr.mxu0 0.0
    %1321 = vmatpush1.msra.mxu0 %v1214
    %1322 = vmatprep.subr.mxu0 0.0
    %1323 = vmatpush1.msra.mxu0 %v1215
    %1324 = vmatprep.subr.mxu0 0.0
    %1325 = vmatpush1.msra.mxu0 %v1216
    %1326 = vmatprep.subr.mxu0 0.0
    %1327 = vmatpush1.msra.mxu0 %v1217
    %1328 = vmatprep.subr.mxu0 0.0
    %1329 = vmatpush1.msra.mxu0 %v1218
    %1330 = vmatprep.subr.mxu0 0.0
    %1331 = vmatpush1.msra.mxu0 %v1219
    %1332 = vmatprep.subr.mxu0 0.0
    %1333 = vmatpush1.msra.mxu0 %v1220
    %1334 = vmatprep.subr.mxu0 0.0
    %1335 = vmatpush1.msra.mxu0 %v1221
    %1336 = vmatprep.subr.mxu0 0.0
    %1337 = vmatpush1.msra.mxu0 %v1222
    %1338 = vmatprep.subr.mxu0 0.0
    %1339 = vmatpush1.msra.mxu0 %v1223
    %1340 = vmatprep.subr.mxu0 0.0
    %1341 = vmatpush1.msra.mxu0 %v1224
    %1342 = vmatprep.subr.mxu0 0.0
    %1343 = vmatpush1.msra.mxu0 %v1225
    %1344 = vmatprep.subr.mxu0 0.0
    %1345 = vmatpush1.msra.mxu0 %v1226
    %1346 = vmatprep.subr.mxu0 0.0
    %1347 = vmatpush1.msra.mxu0 %v1227
    %1348 = vmatprep.subr.mxu0 0.0
    %1349 = vmatpush1.msra.mxu0 %v1228
    %1350 = vmatprep.subr.mxu0 0.0
    %1351 = vmatpush1.msra.mxu0 %v1229
    %1352 = vmatprep.subr.mxu0 0.0
    %1353 = vmatpush1.msra.mxu0 %v1230
    %1354 = vmatprep.subr.mxu0 0.0
    %1355 = vmatpush1.msra.mxu0 %v1231
    %1356 = vmatprep.subr.mxu0 0.0
    %1357 = vmatpush1.msra.mxu0 %v1232
    %1358 = vmatprep.subr.mxu0 0.0
    %1359 = vmatpush1.msra.mxu0 %v1233
    %1360 = vmatprep.subr.mxu0 0.0
    %1361 = vmatpush1.msra.mxu0 %v1234
    %1362 = vmatprep.subr.mxu0 0.0
    %1363 = vmatpush1.msra.mxu0 %v1235
    %1364 = vmatprep.subr.mxu0 0.0
    %1365 = vmatpush1.msra.mxu0 %v1236
    %1366 = vmatprep.subr.mxu0 0.0
    %1367 = vmatpush1.msra.mxu0 %v1237
    %1368 = vmatprep.subr.mxu0 0.0
    %1369 = vmatpush1.msra.mxu0 %v1238
    %1370 = vmatprep.subr.mxu0 0.0
    %1371 = vmatpush1.msra.mxu0 %v1239
    %1372 = vmatprep.subr.mxu0 0.0
    %1373 = vmatpush1.msra.mxu0 %v1240
    %1374 = vmatprep.subr.mxu0 0.0
    %1375 = vmatpush1.msra.mxu0 %v1241
    %1376 = vmatprep.subr.mxu0 0.0
    %1377 = vmatpush1.msra.mxu0 %v1242
    %1378 = vmatprep.mubr.f32.mxu0 %v1206
    %1379 = vmatmul.mubr.f32.gmra.mrb[0].mxu0 %v1205
    %v1380 = vpop.f32.mrb[0].mxu0
    %v1381 = vadd.f32 %v1312, %v1380
    %v1382 = vpop.f32.mrb[0].mxu0
    %1383 = vdwg.mxu0
    %1384 = vmatprep.subr.mxu0 0.0
    %1385 = vmatpush1.msra.mxu0 %v1243
    %1386 = vmatprep.subr.mxu0 0.0
    %1387 = vmatpush1.msra.mxu0 %v1244
    %1388 = vmatprep.subr.mxu0 0.0
    %1389 = vmatpush1.msra.mxu0 %v1245
    %1390 = vmatprep.subr.mxu0 0.0
    %1391 = vmatpush1.msra.mxu0 %v1246
    %1392 = vmatprep.subr.mxu0 0.0
    %1393 = vmatpush1.msra.mxu0 %v1247
    %1394 = vmatprep.subr.mxu0 0.0
    %1395 = vmatpush1.msra.mxu0 %v1248
    %1396 = vmatprep.subr.mxu0 0.0
    %1397 = vmatpush1.msra.mxu0 %v1249
    %1398 = vmatprep.subr.mxu0 0.0
    %1399 = vmatpush1.msra.mxu0 %v1250
    %1400 = vmatprep.subr.mxu0 0.0
    %1401 = vmatpush1.msra.mxu0 %v1251
    %1402 = vmatprep.subr.mxu0 0.0
    %1403 = vmatpush1.msra.mxu0 %v1252
    %1404 = vmatprep.subr.mxu0 0.0
    %1405 = vmatpush1.msra.mxu0 %v1253
    %1406 = vmatprep.subr.mxu0 0.0
    %1407 = vmatpush1.msra.mxu0 %v1254
    %1408 = vmatprep.subr.mxu0 0.0
    %1409 = vmatpush1.msra.mxu0 %v1255
    %1410 = vmatprep.subr.mxu0 0.0
    %1411 = vmatpush1.msra.mxu0 %v1256
    %1412 = vmatprep.subr.mxu0 0.0
    %1413 = vmatpush1.msra.mxu0 %v1257
    %1414 = vmatprep.subr.mxu0 0.0
    %1415 = vmatpush1.msra.mxu0 %v1258
    %1416 = vmatprep.subr.mxu0 0.0
    %1417 = vmatpush1.msra.mxu0 %v1259
    %1418 = vmatprep.subr.mxu0 0.0
    %1419 = vmatpush1.msra.mxu0 %v1260
    %1420 = vmatprep.subr.mxu0 0.0
    %1421 = vmatpush1.msra.mxu0 %v1261
    %1422 = vmatprep.subr.mxu0 0.0
    %1423 = vmatpush1.msra.mxu0 %v1262
    %1424 = vmatprep.subr.mxu0 0.0
    %1425 = vmatpush1.msra.mxu0 %v1263
    %1426 = vmatprep.subr.mxu0 0.0
    %1427 = vmatpush1.msra.mxu0 %v1264
    %1428 = vmatprep.subr.mxu0 0.0
    %1429 = vmatpush1.msra.mxu0 %v1265
    %1430 = vmatprep.subr.mxu0 0.0
    %1431 = vmatpush1.msra.mxu0 %v1266
    %1432 = vmatprep.subr.mxu0 0.0
    %1433 = vmatpush1.msra.mxu0 %v1267
    %1434 = vmatprep.subr.mxu0 0.0
    %1435 = vmatpush1.msra.mxu0 %v1268
    %1436 = vmatprep.subr.mxu0 0.0
    %1437 = vmatpush1.msra.mxu0 %v1269
    %1438 = vmatprep.subr.mxu0 0.0
    %1439 = vmatpush1.msra.mxu0 %v1270
    %1440 = vmatprep.subr.mxu0 0.0
    %1441 = vmatpush1.msra.mxu0 %v1271
    %1442 = vmatprep.subr.mxu0 0.0
    %1443 = vmatpush1.msra.mxu0 %v1272
    %1444 = vmatprep.subr.mxu0 0.0
    %1445 = vmatpush1.msra.mxu0 %v1273
    %1446 = vmatprep.subr.mxu0 0.0
    %1447 = vmatpush1.msra.mxu0 %v1274
    %1448 = vmatprep.mubr.f32.mxu0 %v1208
    %1449 = vmatmul.mubr.f32.gmra.mrb[0].mxu0 %v1207
    %v1450 = vpop.f32.mrb[0].mxu0
    %v1451 = vadd.f32 %v1381, %v1450
    %v1452 = vpop.f32.mrb[0].mxu0
    %1453 = vdwg.mxu0
    %1454 = vmatprep.subr.mxu0 0.0
    %1455 = vmatpush1.msra.mxu0 %v1275
    %1456 = vmatprep.subr.mxu0 0.0
    %1457 = vmatpush1.msra.mxu0 %v1276
    %1458 = vmatprep.subr.mxu0 0.0
    %1459 = vmatpush1.msra.mxu0 %v1277
    %1460 = vmatprep.subr.mxu0 0.0
    %1461 = vmatpush1.msra.mxu0 %v1278
    %1462 = vmatprep.subr.mxu0 0.0
    %1463 = vmatpush1.msra.mxu0 %v1279
    %1464 = vmatprep.subr.mxu0 0.0
    %1465 = vmatpush1.msra.mxu0 %v1280
    %1466 = vmatprep.subr.mxu0 0.0
    %1467 = vmatpush1.msra.mxu0 %v1281
    %1468 = vmatprep.subr.mxu0 0.0
    %1469 = vmatpush1.msra.mxu0 %v1282
    %1470 = vmatprep.subr.mxu0 0.0
    %1471 = vmatpush1.msra.mxu0 %v1283
    %1472 = vmatprep.subr.mxu0 0.0
    %1473 = vmatpush1.msra.mxu0 %v1284
    %1474 = vmatprep.subr.mxu0 0.0
    %1475 = vmatpush1.msra.mxu0 %v1285
    %1476 = vmatprep.subr.mxu0 0.0
    %1477 = vmatpush1.msra.mxu0 %v1286
    %1478 = vmatprep.subr.mxu0 0.0
    %1479 = vmatpush1.msra.mxu0 %v1287
    %1480 = vmatprep.subr.mxu0 0.0
    %1481 = vmatpush1.msra.mxu0 %v1288
    %1482 = vmatprep.subr.mxu0 0.0
    %1483 = vmatpush1.msra.mxu0 %v1289
    %1484 = vmatprep.subr.mxu0 0.0
    %1485 = vmatpush1.msra.mxu0 %v1290
    %1486 = vmatprep.subr.mxu0 0.0
    %1487 = vmatpush1.msra.mxu0 %v1291
    %1488 = vmatprep.subr.mxu0 0.0
    %1489 = vmatpush1.msra.mxu0 %v1292
    %1490 = vmatprep.subr.mxu0 0.0
    %1491 = vmatpush1.msra.mxu0 %v1293
    %1492 = vmatprep.subr.mxu0 0.0
    %1493 = vmatpush1.msra.mxu0 %v1294
    %1494 = vmatprep.subr.mxu0 0.0
    %1495 = vmatpush1.msra.mxu0 %v1295
    %1496 = vmatprep.subr.mxu0 0.0
    %1497 = vmatpush1.msra.mxu0 %v1296
    %1498 = vmatprep.subr.mxu0 0.0
    %1499 = vmatpush1.msra.mxu0 %v1297
    %1500 = vmatprep.subr.mxu0 0.0
    %1501 = vmatpush1.msra.mxu0 %v1298
    %1502 = vmatprep.subr.mxu0 0.0
    %1503 = vmatpush1.msra.mxu0 %v1299
    %1504 = vmatprep.subr.mxu0 0.0
    %1505 = vmatpush1.msra.mxu0 %v1300
    %1506 = vmatprep.subr.mxu0 0.0
    %1507 = vmatpush1.msra.mxu0 %v1301
    %1508 = vmatprep.subr.mxu0 0.0
    %1509 = vmatpush1.msra.mxu0 %v1302
    %1510 = vmatprep.subr.mxu0 0.0
    %1511 = vmatpush1.msra.mxu0 %v1303
    %1512 = vmatprep.subr.mxu0 0.0
    %1513 = vmatpush1.msra.mxu0 %v1304
    %1514 = vmatprep.subr.mxu0 0.0
    %1515 = vmatpush1.msra.mxu0 %v1305
    %1516 = vmatprep.subr.mxu0 0.0
    %1517 = vmatpush1.msra.mxu0 %v1306
    %1518 = vmatprep.mubr.f32.mxu0 %v1210
    %1519 = vmatmul.mubr.f32.gmra.mrb[0].mxu0 %v1209
    %v1520 = vpop.f32.mrb[0].mxu0
    %v1521 = vadd.f32 %v1451, %v1520
    %v1522 = vpop.f32.mrb[0].mxu0
    %1523 = vdwg.mxu0
    %1524 = vst [vmem:[#allocation13] sm:$0x3] %v1521
    // Predicated region
    $region54: #{tpu_custom_call.1} parent=1 // pred_check
      _
    $region55: #{tpu_custom_call.1} parent=1 // pred_check_branch
      %1526 = sbr.rel (0) target = $region57
    $region56: #{tpu_custom_call.1} parent=1 // pred_region
      %s1528 = ssub.s32 32, 32
      %1529 = vsyncadd [#allocation4], %s1528
      %s1531 = sshll.u32 [#allocation13], 4
      %s1532 = int_to_ptr.vmem [resolvable:$true] %s1531
      %1534 = dma.vmem_to_hbm [thread:$0]  %s1532, 32, %s7, [#allocation4]
    $region57: #{tpu_custom_call.1} parent=1 // pred_fallthru
      _
    // Predicated region
    $region58: #{tpu_custom_call.1} parent=1 // pred_check
      _
    $region59: #{tpu_custom_call.1} parent=1 // pred_check_branch
      %1536 = sbr.rel (0) target = $region61
    $region60: #{tpu_custom_call.1} parent=1 // pred_region
      %1537 = dma.done [#allocation4], 32
    $region61: #{tpu_custom_call.1} parent=1 // pred_fallthru
      _
    %1538 = vsyncpa [#allocation3], 1
    %1539 = vsyncpa [#allocation6], 1
    %1540 = vsyncpa [#allocation9], 1
    %1541 = vsyncpa [#allocation12], 1
    %1542 = vsyncpa [#allocation4], 1

</llo_original>
